<compile_context>
chip_gen: v6e
topology: v6e:2x2x1
jax: 0.10.0
libtpu: 0.0.40
codegen_flags: <defaults>
</compile_context>

<pallas_src>
import numpy as np

import jax
import jax.numpy as jnp
from jax.experimental import pallas as pl
from jax.experimental.pallas import tpu as pltpu

EDGE_DIM = 9
LEAKY_GATV2 = 0.2   # GATv2Conv negative_slope default
LEAKY_ENC = 0.01    # F.leaky_relu default in the encoder forward
NEG_INF = -1e30


def _round_up(a, b):
    return (a + b - 1) // b * b


# --------------------------------------------------------------------------
# Pallas kernel: masked GATv2 attention + aggregation for a tile of targets.
# grid = (target_tile,)
# --------------------------------------------------------------------------
def gatv2_attn_kernel(xl_ref, xr_ref, adj_ref, ea_ref, we_ref, att_ref,
                      bias_ref, out_ref):
    # ref shapes (per grid step, T = target tile, N = padded #sources):
    #   xl_ref  [H, N, C]   lin_l(x) + bl for ALL source nodes   (resident)
    #   xr_ref  [H, T, C]   lin_r(x) + br for this target tile
    #   adj_ref [T, N]      incoming-edge mask (sources on lanes)
    #   ea_ref  [T, N, 9]   edge attributes of edges j -> i
    #   we_ref  [H, 9, C]   lin_edge weights                     (resident)
    #   att_ref [H, 1, C]   attention vectors                    (resident)
    #   bias_ref[1, C]      output bias                          (resident)
    #   out_ref [T, C]      layer output rows for this tile (written once)
    t, n = adj_ref.shape
    n_heads = xl_ref.shape[0]
    c = xl_ref.shape[2]

    adj = adj_ref[...]                       # [T, N]
    mask = adj > 0.0
    ea_flat = ea_ref[...].reshape(t * n, EDGE_DIM)

    acc = jnp.zeros((t, c), jnp.float32)
    for h in range(n_heads):                 # heads folded into the body (H small, static)
        xl_h = xl_ref[h]                     # [N, C]
        xr_h = xr_ref[h]                     # [T, C]
        # lin_edge(e_ij): one MXU matmul over the whole tile.
        e = jnp.dot(ea_flat, we_ref[h], preferred_element_type=jnp.float32)
        # GATv2 logits: att . leaky_relu(x_r[i] + x_l[j] + lin_edge(e_ij))
        s = e.reshape(t, n, c) + xl_h[None, :, :] + xr_h[:, None, :]
        s = jnp.where(s >= 0, s, LEAKY_GATV2 * s)
        logit = jnp.sum(s * att_ref[h][None, :, :], axis=-1)       # [T, N]

        # masked softmax over sources (lane axis)
        logit = jnp.where(mask, logit, NEG_INF)
        m = jnp.max(logit, axis=-1, keepdims=True)                 # [T, 1]
        p = jnp.where(mask, jnp.exp(logit - m), 0.0)               # [T, N]
        denom = jnp.sum(p, axis=-1, keepdims=True)                 # [T, 1]
        inv = pl.reciprocal(jnp.maximum(denom, 1e-30), approx=False)
        alpha = p * inv                                            # [T, N]

        # aggregate messages: alpha @ x_l  (MXU)
        acc = acc + jnp.dot(alpha, xl_h, preferred_element_type=jnp.float32)

    # concat=False -> mean over heads (compile-time 1/H), add bias; single store.
    out_ref[...] = acc * (1.0 / n_heads) + bias_ref[...]


def gatv2_layer(x, adj, ea, p, *, tile_t=128):
    """One GATv2Conv(F_in -> C, heads=H, concat=False, edge_dim=9) layer."""
    n = x.shape[0]
    heads, _, c = p["wl"].shape

    # Hoisted target-independent projections: one batched MXU-shaped matmul each
    # (computed once per layer instead of once per target node per head).
    xl = jnp.einsum("nf,hfc->hnc", x, p["wl"],
                    preferred_element_type=jnp.float32) + p["bl"]   # [H, N, C]
    xr = jnp.einsum("nf,hfc->hnc", x, p["wr"],
                    preferred_element_type=jnp.float32) + p["br"]   # [H, N, C]

    # Target tile size: multiple of 8 sublanes, at most 128 rows per step.
    t = min(tile_t, _round_up(n, 8))
    n_pad = _round_up(n, t)
    if n_pad != n:
        pad = n_pad - n
        xl = jnp.pad(xl, ((0, 0), (0, pad), (0, 0)))
        xr = jnp.pad(xr, ((0, 0), (0, pad), (0, 0)))
        adj = jnp.pad(adj, ((0, pad), (0, pad)))
        ea = jnp.pad(ea, ((0, pad), (0, pad), (0, 0)))

    grid = (n_pad // t,)
    out = pl.pallas_call(
        gatv2_attn_kernel,
        out_shape=jax.ShapeDtypeStruct((n_pad, c), jnp.float32),
        grid=grid,
        in_specs=[
            pl.BlockSpec((heads, n_pad, c), lambda i: (0, 0, 0)),      # XL (all sources, resident)
            pl.BlockSpec((heads, t, c), lambda i: (0, i, 0)),          # XR tile
            pl.BlockSpec((t, n_pad), lambda i: (i, 0)),                # adjacency tile
            pl.BlockSpec((t, n_pad, EDGE_DIM), lambda i: (i, 0, 0)),   # edge-attr tile
            pl.BlockSpec((heads, EDGE_DIM, c), lambda i: (0, 0, 0)),   # lin_edge weights
            pl.BlockSpec((heads, 1, c), lambda i: (0, 0, 0)),          # attention vectors
            pl.BlockSpec((1, c), lambda i: (0, 0)),                    # output bias
        ],
        out_specs=pl.BlockSpec((t, c), lambda i: (i, 0)),
        compiler_params=pltpu.CompilerParams(
            dimension_semantics=("parallel",)),
    )(xl, xr, adj, ea, p["we"], p["att"], p["bias"])
    return out[:n]


# --------------------------------------------------------------------------
# Plain-JAX glue: edge list -> dense graph (remove self loops, re-add them
# with fill_value='mean', as PyG GATv2Conv does by default).
# --------------------------------------------------------------------------
def build_dense_graph(edge_index, edge_attr, num_nodes):
    src, dst = edge_index[0], edge_index[1]
    keep = (src != dst).astype(jnp.float32)              # remove existing self loops

    adj = jnp.zeros((num_nodes, num_nodes), jnp.float32).at[dst, src].add(keep)
    adj = jnp.minimum(adj, 1.0)                          # assumes no duplicate directed edges
    ea = jnp.zeros((num_nodes, num_nodes, EDGE_DIM), jnp.float32)
    ea = ea.at[dst, src].add(edge_attr * keep[:, None])

    # self-loop attr = mean of incoming edge attrs (fill_value='mean')
    sums = jnp.zeros((num_nodes, EDGE_DIM), jnp.float32).at[dst].add(edge_attr * keep[:, None])
    cnts = jnp.zeros((num_nodes,), jnp.float32).at[dst].add(keep)
    loop_attr = sums / jnp.maximum(cnts, 1.0)[:, None]

    diag = jnp.arange(num_nodes)
    adj = adj.at[diag, diag].set(1.0)
    ea = ea.at[diag, diag].set(loop_attr)
    return adj, ea                                       # adj [N,N], ea [N,N,9]


# --------------------------------------------------------------------------
# Encoder forward (Pallas attention layers + plain-JAX gating glue)
# --------------------------------------------------------------------------
def encoder_forward(x, edge_index, edge_attr, params):
    n = x.shape[0]
    adj, ea = build_dense_graph(edge_index, edge_attr, n)
    gates = jax.nn.sigmoid(params["gates"])
    h = gatv2_layer(x, adj, ea, params["layers"][0])
    for i, lp in enumerate(params["layers"][1:]):
        h = jax.nn.leaky_relu(h, LEAKY_ENC)
        y = gatv2_layer(h, adj, ea, lp)
        h = gates[i] * y + (1.0 - gates[i]) * h
    return h


# --------------------------------------------------------------------------
# Pure-JAX reference (same dense math) for validation
# --------------------------------------------------------------------------
def gatv2_layer_ref(x, adj, ea, p):
    bl = p["bl"][:, 0, :]
    br = p["br"][:, 0, :]
    att = p["att"][:, 0, :]
    xl = jnp.einsum("nf,hfc->nhc", x, p["wl"]) + bl[None]
    xr = jnp.einsum("nf,hfc->nhc", x, p["wr"]) + br[None]
    e = jnp.einsum("ijd,hdc->ijhc", ea, p["we"])
    s = xr[:, None] + xl[None, :] + e
    s = jnp.where(s >= 0, s, LEAKY_GATV2 * s)
    logit = jnp.einsum("ijhc,hc->ijh", s, att)
    logit = jnp.where(adj[:, :, None] > 0, logit, NEG_INF)
    m = jnp.max(logit, axis=1, keepdims=True)
    pm = jnp.exp(logit - m) * adj[:, :, None]
    denom = jnp.maximum(jnp.sum(pm, axis=1, keepdims=True), 1e-30)
    alpha = pm / denom
    out = jnp.einsum("ijh,jhc->ihc", alpha, xl)
    return out.mean(axis=1) + p["bias"][0]


def encoder_ref(x, edge_index, edge_attr, params):
    n = x.shape[0]
    adj, ea = build_dense_graph(edge_index, edge_attr, n)
    gates = jax.nn.sigmoid(params["gates"])
    h = gatv2_layer_ref(x, adj, ea, params["layers"][0])
    for i, lp in enumerate(params["layers"][1:]):
        h = jax.nn.leaky_relu(h, LEAKY_ENC)
        y = gatv2_layer_ref(h, adj, ea, lp)
        h = gates[i] * y + (1.0 - gates[i]) * h
    return h


# --------------------------------------------------------------------------
# Deterministic parameter init (synthetic; mirrors shapes in the torch module)
# --------------------------------------------------------------------------
def _glorot(key, shape, fan_in, fan_out):
    lim = (6.0 / (fan_in + fan_out)) ** 0.5
    return jax.random.uniform(key, shape, jnp.float32, -lim, lim)


def init_gatv2_params(key, f_in, hidden, heads):
    c = hidden
    k = jax.random.split(key, 4)
    return dict(
        wl=_glorot(k[0], (heads, f_in, c), f_in, heads * c),
        wr=_glorot(k[1], (heads, f_in, c), f_in, heads * c),
        we=_glorot(k[2], (heads, EDGE_DIM, c), EDGE_DIM, heads * c),
        att=_glorot(k[3], (heads, 1, c), c, 1),
        bl=jnp.full((heads, 1, c), 0.01, jnp.float32),
        br=jnp.full((heads, 1, c), 0.01, jnp.float32),
        bias=jnp.zeros((1, c), jnp.float32),
    )


def init_encoder_params(key, f_in, hidden, heads, n_layers):
    keys = jax.random.split(key, n_layers + 1)
    layers = [init_gatv2_params(keys[0], f_in, hidden, heads)]
    for i in range(1, n_layers):
        layers.append(init_gatv2_params(keys[i], hidden, hidden, heads))
    gates = jax.random.normal(keys[n_layers], (n_layers,), jnp.float32)
    return dict(layers=layers, gates=gates)


# --------------------------------------------------------------------------
if __name__ == "__main__":
    N, F_IN, HID, HEADS, LAYERS, E = 16, 8, 16, 2, 3, 40

    key = jax.random.PRNGKey(0)
    k_edges, k_attr, k_x, k_param = jax.random.split(key, 4)

    # unique directed edges, no self loops
    ii, jj = np.meshgrid(np.arange(N), np.arange(N), indexing="ij")
    off = ii != jj
    pairs = np.stack([ii[off], jj[off]], axis=1)          # [(N*(N-1)), 2] (src, dst)
    sel = np.asarray(jax.random.choice(k_edges, pairs.shape[0], (E,), replace=False))
    edge_index = jnp.asarray(pairs[sel].T, dtype=jnp.int32)   # [2, E]
    edge_attr = jax.random.normal(k_attr, (E, EDGE_DIM), jnp.float32)
    x = jax.random.normal(k_x, (N, F_IN), jnp.float32)

    params = init_encoder_params(k_param, F_IN, HID, HEADS, LAYERS)

    fwd = jax.jit(encoder_forward)
    out = jax.block_until_ready(fwd(x, edge_index, edge_attr, params))
    assert out.shape == (N, HID)

    ref = jax.block_until_ready(encoder_ref(x, edge_index, edge_attr, params))
    np.testing.assert_allclose(np.asarray(out), np.asarray(ref), rtol=2e-4, atol=2e-4)

    print("KERNEL_OK")
</pallas_src>

<mosaic_0001>
module attributes {stable_mosaic.version = 11 : i64} {
  func.func private @main(%arg0: i32) attributes {dimension_semantics = [#tpu.dimension_semantics<core_parallel>], iteration_bounds = array<i64: 2>, tpu.core_type = #tpu.core_type<sc_scalar_subcore>, window_params = []} {
    return
  }
}

module attributes {stable_mosaic.version = 11 : i64} {
  func.func private @main(%arg0: i32) attributes {dimension_semantics = [#tpu.dimension_semantics<core_parallel>], iteration_bounds = array<i64: 2>, tpu.core_type = #tpu.core_type<sc_scalar_subcore>, window_params = []} {
    return
  }
}

module attributes {stable_mosaic.version = 11 : i64} {
  func.func @gatv2_attn_kernel(%arg0: i32, %arg1: memref<2x16x16xf32, #tpu.memory_space<vmem>>, %arg2: memref<2x16x16xf32, #tpu.memory_space<vmem>>, %arg3: memref<16x16xf32, #tpu.memory_space<vmem>>, %arg4: memref<16x16x9xf32, #tpu.memory_space<vmem>>, %arg5: memref<2x9x16xf32, #tpu.memory_space<vmem>>, %arg6: memref<2x1x16xf32, #tpu.memory_space<vmem>>, %arg7: memref<1x16xf32, #tpu.memory_space<vmem>>, %arg8: memref<16x16xf32, #tpu.memory_space<vmem>>) attributes {dimension_semantics = [#tpu.dimension_semantics<parallel>], iteration_bounds = array<i64: 1>, scalar_prefetch = 0 : i64, scratch_operands = 0 : i64, tpu.core_type = #tpu.core_type<tc>, window_params = [{pipeline_mode = #tpu.pipeline_mode<synchronous>, transform_indices = @transform_0, window_bounds = array<i64: 2, 16, 16>}, {transform_indices = @transform_1, window_bounds = array<i64: 2, 16, 16>}, {transform_indices = @transform_2, window_bounds = array<i64: 16, 16>}, {transform_indices = @transform_3, window_bounds = array<i64: 16, 16, 9>}, {pipeline_mode = #tpu.pipeline_mode<synchronous>, transform_indices = @transform_4, window_bounds = array<i64: 2, 9, 16>}, {pipeline_mode = #tpu.pipeline_mode<synchronous>, transform_indices = @transform_5, window_bounds = array<i64: 2, 1, 16>}, {pipeline_mode = #tpu.pipeline_mode<synchronous>, transform_indices = @transform_6, window_bounds = array<i64: 1, 16>}, {transform_indices = @transform_7, window_bounds = array<i64: 16, 16>}]} {
    %c0 = arith.constant 0 : index
    %c0_0 = arith.constant 0 : index
    %0 = vector.load %arg3[%c0, %c0_0] : memref<16x16xf32, #tpu.memory_space<vmem>>, vector<16x16xf32>
    %cst = arith.constant 0.000000e+00 : f32
    %1 = vector.broadcast %cst : f32 to vector<16x16xf32>
    %2 = arith.cmpf ogt, %0, %1 : vector<16x16xf32>
    %c0_1 = arith.constant 0 : index
    %c0_2 = arith.constant 0 : index
    %c0_3 = arith.constant 0 : index
    %3 = vector.load %arg4[%c0_1, %c0_2, %c0_3] : memref<16x16x9xf32, #tpu.memory_space<vmem>>, vector<16x16x9xf32>
    %4 = vector.shape_cast %3 : vector<16x16x9xf32> to vector<256x9xf32>
    %cst_4 = arith.constant 0.000000e+00 : f32
    %5 = vector.broadcast %cst_4 : f32 to vector<16x16xf32>
    %c0_5 = arith.constant 0 : index
    %c0_6 = arith.constant 0 : index
    %c0_7 = arith.constant 0 : index
    %6 = vector.load %arg1[%c0_5, %c0_6, %c0_7] : memref<2x16x16xf32, #tpu.memory_space<vmem>>, vector<1x16x16xf32>
    %7 = vector.shape_cast %6 : vector<1x16x16xf32> to vector<16x16xf32>
    %c0_8 = arith.constant 0 : index
    %c0_9 = arith.constant 0 : index
    %c0_10 = arith.constant 0 : index
    %8 = vector.load %arg2[%c0_8, %c0_9, %c0_10] : memref<2x16x16xf32, #tpu.memory_space<vmem>>, vector<1x16x16xf32>
    %9 = vector.shape_cast %8 : vector<1x16x16xf32> to vector<16x16xf32>
    %c0_11 = arith.constant 0 : index
    %c0_12 = arith.constant 0 : index
    %c0_13 = arith.constant 0 : index
    %10 = vector.load %arg5[%c0_11, %c0_12, %c0_13] : memref<2x9x16xf32, #tpu.memory_space<vmem>>, vector<1x9x16xf32>
    %11 = vector.shape_cast %10 : vector<1x9x16xf32> to vector<9x16xf32>
    %cst_14 = arith.constant dense<0.000000e+00> : vector<256x16xf32>
    %12 = tpu.matmul %4, %11, %cst_14 {dimension_numbers = #tpu.dot_dimension_numbers<[1], [0], [0], [1], [0, 0, 1, 1], [], []>} : vector<256x9xf32>, vector<9x16xf32>, vector<256x16xf32> -> vector<256x16xf32>
    %13 = vector.shape_cast %12 : vector<256x16xf32> to vector<16x16x16xf32>
    %14 = vector.shape_cast %7 : vector<16x16xf32> to vector<1x16x16xf32>
    %15 = vector.broadcast %14 : vector<1x16x16xf32> to vector<16x16x16xf32>
    %16 = arith.addf %13, %15 : vector<16x16x16xf32>
    %17 = vector.shape_cast %9 : vector<16x16xf32> to vector<16x1x16xf32>
    %18 = vector.broadcast %17 : vector<16x1x16xf32> to vector<16x16x16xf32>
    %19 = arith.addf %16, %18 : vector<16x16x16xf32>
    %cst_15 = arith.constant 0.000000e+00 : f32
    %20 = vector.broadcast %cst_15 : f32 to vector<16x16x16xf32>
    %21 = arith.cmpf oge, %19, %20 : vector<16x16x16xf32>
    %cst_16 = arith.constant 2.000000e-01 : f32
    %22 = vector.broadcast %cst_16 : f32 to vector<16x16x16xf32>
    %23 = arith.mulf %22, %19 : vector<16x16x16xf32>
    %24 = arith.select %21, %19, %23 : vector<16x16x16xi1>, vector<16x16x16xf32>
    %c0_17 = arith.constant 0 : index
    %c0_18 = arith.constant 0 : index
    %c0_19 = arith.constant 0 : index
    %25 = vector.load %arg6[%c0_17, %c0_18, %c0_19] : memref<2x1x16xf32, #tpu.memory_space<vmem>>, vector<1x1x16xf32>
    %26 = vector.shape_cast %25 : vector<1x1x16xf32> to vector<1x16xf32>
    %27 = vector.shape_cast %26 : vector<1x16xf32> to vector<1x1x16xf32>
    %28 = vector.broadcast %27 : vector<1x1x16xf32> to vector<16x16x16xf32>
    %29 = arith.mulf %24, %28 : vector<16x16x16xf32>
    %cst_20 = arith.constant dense<0.000000e+00> : vector<16x16xf32>
    %30 = vector.multi_reduction <add>, %29, %cst_20 [2] : vector<16x16x16xf32> to vector<16x16xf32>
    %cst_21 = arith.constant -1.000000e+30 : f32
    %31 = vector.broadcast %cst_21 : f32 to vector<16x16xf32>
    %32 = arith.select %2, %30, %31 : vector<16x16xi1>, vector<16x16xf32>
    %cst_22 = arith.constant dense<0xFF800000> : vector<16xf32>
    %33 = vector.multi_reduction <maximumf>, %32, %cst_22 [1] : vector<16x16xf32> to vector<16xf32>
    %34 = vector.shape_cast %33 : vector<16xf32> to vector<16x1xf32>
    %35 = vector.broadcast %34 : vector<16x1xf32> to vector<16x16xf32>
    %36 = arith.subf %32, %35 : vector<16x16xf32>
    %37 = math.exp %36 : vector<16x16xf32>
    %cst_23 = arith.constant 0.000000e+00 : f32
    %38 = vector.broadcast %cst_23 : f32 to vector<16x16xf32>
    %39 = arith.select %2, %37, %38 : vector<16x16xi1>, vector<16x16xf32>
    %cst_24 = arith.constant dense<0.000000e+00> : vector<16xf32>
    %40 = vector.multi_reduction <add>, %39, %cst_24 [1] : vector<16x16xf32> to vector<16xf32>
    %41 = vector.shape_cast %40 : vector<16xf32> to vector<16x1xf32>
    %cst_25 = arith.constant 1.000000e-30 : f32
    %42 = vector.broadcast %cst_25 : f32 to vector<16x1xf32>
    %43 = arith.maximumf %41, %42 : vector<16x1xf32>
    %44 = tpu.reciprocal %43 : vector<16x1xf32> -> vector<16x1xf32>
    %45 = vector.broadcast %44 : vector<16x1xf32> to vector<16x16xf32>
    %46 = arith.mulf %39, %45 : vector<16x16xf32>
    %cst_26 = arith.constant dense<0.000000e+00> : vector<16x16xf32>
    %47 = tpu.matmul %46, %7, %cst_26 {dimension_numbers = #tpu.dot_dimension_numbers<[1], [0], [0], [1], [0, 0, 1, 1], [], []>} : vector<16x16xf32>, vector<16x16xf32>, vector<16x16xf32> -> vector<16x16xf32>
    %48 = arith.addf %5, %47 : vector<16x16xf32>
    %c1 = arith.constant 1 : index
    %c0_27 = arith.constant 0 : index
    %c0_28 = arith.constant 0 : index
    %49 = vector.load %arg1[%c1, %c0_27, %c0_28] : memref<2x16x16xf32, #tpu.memory_space<vmem>>, vector<1x16x16xf32>
    %50 = vector.shape_cast %49 : vector<1x16x16xf32> to vector<16x16xf32>
    %c1_29 = arith.constant 1 : index
    %c0_30 = arith.constant 0 : index
    %c0_31 = arith.constant 0 : index
    %51 = vector.load %arg2[%c1_29, %c0_30, %c0_31] : memref<2x16x16xf32, #tpu.memory_space<vmem>>, vector<1x16x16xf32>
    %52 = vector.shape_cast %51 : vector<1x16x16xf32> to vector<16x16xf32>
    %c1_32 = arith.constant 1 : index
    %c0_33 = arith.constant 0 : index
    %c0_34 = arith.constant 0 : index
    %53 = vector.load %arg5[%c1_32, %c0_33, %c0_34] : memref<2x9x16xf32, #tpu.memory_space<vmem>>, vector<1x9x16xf32>
    %54 = vector.shape_cast %53 : vector<1x9x16xf32> to vector<9x16xf32>
    %cst_35 = arith.constant dense<0.000000e+00> : vector<256x16xf32>
    %55 = tpu.matmul %4, %54, %cst_35 {dimension_numbers = #tpu.dot_dimension_numbers<[1], [0], [0], [1], [0, 0, 1, 1], [], []>} : vector<256x9xf32>, vector<9x16xf32>, vector<256x16xf32> -> vector<256x16xf32>
    %56 = vector.shape_cast %55 : vector<256x16xf32> to vector<16x16x16xf32>
    %57 = vector.shape_cast %50 : vector<16x16xf32> to vector<1x16x16xf32>
    %58 = vector.broadcast %57 : vector<1x16x16xf32> to vector<16x16x16xf32>
    %59 = arith.addf %56, %58 : vector<16x16x16xf32>
    %60 = vector.shape_cast %52 : vector<16x16xf32> to vector<16x1x16xf32>
    %61 = vector.broadcast %60 : vector<16x1x16xf32> to vector<16x16x16xf32>
    %62 = arith.addf %59, %61 : vector<16x16x16xf32>
    %cst_36 = arith.constant 0.000000e+00 : f32
    %63 = vector.broadcast %cst_36 : f32 to vector<16x16x16xf32>
    %64 = arith.cmpf oge, %62, %63 : vector<16x16x16xf32>
    %cst_37 = arith.constant 2.000000e-01 : f32
    %65 = vector.broadcast %cst_37 : f32 to vector<16x16x16xf32>
    %66 = arith.mulf %65, %62 : vector<16x16x16xf32>
    %67 = arith.select %64, %62, %66 : vector<16x16x16xi1>, vector<16x16x16xf32>
    %c1_38 = arith.constant 1 : index
    %c0_39 = arith.constant 0 : index
    %c0_40 = arith.constant 0 : index
    %68 = vector.load %arg6[%c1_38, %c0_39, %c0_40] : memref<2x1x16xf32, #tpu.memory_space<vmem>>, vector<1x1x16xf32>
    %69 = vector.shape_cast %68 : vector<1x1x16xf32> to vector<1x16xf32>
    %70 = vector.shape_cast %69 : vector<1x16xf32> to vector<1x1x16xf32>
    %71 = vector.broadcast %70 : vector<1x1x16xf32> to vector<16x16x16xf32>
    %72 = arith.mulf %67, %71 : vector<16x16x16xf32>
    %cst_41 = arith.constant dense<0.000000e+00> : vector<16x16xf32>
    %73 = vector.multi_reduction <add>, %72, %cst_41 [2] : vector<16x16x16xf32> to vector<16x16xf32>
    %cst_42 = arith.constant -1.000000e+30 : f32
    %74 = vector.broadcast %cst_42 : f32 to vector<16x16xf32>
    %75 = arith.select %2, %73, %74 : vector<16x16xi1>, vector<16x16xf32>
    %cst_43 = arith.constant dense<0xFF800000> : vector<16xf32>
    %76 = vector.multi_reduction <maximumf>, %75, %cst_43 [1] : vector<16x16xf32> to vector<16xf32>
    %77 = vector.shape_cast %76 : vector<16xf32> to vector<16x1xf32>
    %78 = vector.broadcast %77 : vector<16x1xf32> to vector<16x16xf32>
    %79 = arith.subf %75, %78 : vector<16x16xf32>
    %80 = math.exp %79 : vector<16x16xf32>
    %cst_44 = arith.constant 0.000000e+00 : f32
    %81 = vector.broadcast %cst_44 : f32 to vector<16x16xf32>
    %82 = arith.select %2, %80, %81 : vector<16x16xi1>, vector<16x16xf32>
    %cst_45 = arith.constant dense<0.000000e+00> : vector<16xf32>
    %83 = vector.multi_reduction <add>, %82, %cst_45 [1] : vector<16x16xf32> to vector<16xf32>
    %84 = vector.shape_cast %83 : vector<16xf32> to vector<16x1xf32>
    %cst_46 = arith.constant 1.000000e-30 : f32
    %85 = vector.broadcast %cst_46 : f32 to vector<16x1xf32>
    %86 = arith.maximumf %84, %85 : vector<16x1xf32>
    %87 = tpu.reciprocal %86 : vector<16x1xf32> -> vector<16x1xf32>
    %88 = vector.broadcast %87 : vector<16x1xf32> to vector<16x16xf32>
    %89 = arith.mulf %82, %88 : vector<16x16xf32>
    %cst_47 = arith.constant dense<0.000000e+00> : vector<16x16xf32>
    %90 = tpu.matmul %89, %50, %cst_47 {dimension_numbers = #tpu.dot_dimension_numbers<[1], [0], [0], [1], [0, 0, 1, 1], [], []>} : vector<16x16xf32>, vector<16x16xf32>, vector<16x16xf32> -> vector<16x16xf32>
    %91 = arith.addf %48, %90 : vector<16x16xf32>
    %cst_48 = arith.constant 5.000000e-01 : f32
    %92 = vector.broadcast %cst_48 : f32 to vector<16x16xf32>
    %93 = arith.mulf %91, %92 : vector<16x16xf32>
    %c0_49 = arith.constant 0 : index
    %c0_50 = arith.constant 0 : index
    %94 = vector.load %arg7[%c0_49, %c0_50] : memref<1x16xf32, #tpu.memory_space<vmem>>, vector<1x16xf32>
    %95 = vector.broadcast %94 : vector<1x16xf32> to vector<16x16xf32>
    %96 = arith.addf %93, %95 : vector<16x16xf32>
    %c0_51 = arith.constant 0 : index
    %c0_52 = arith.constant 0 : index
    %97 = vector.load %arg8[%c0_51, %c0_52] : memref<16x16xf32, #tpu.memory_space<vmem>>, vector<16x16xf32>
    tpu.vector_store %arg8[%c0_51, %c0_52], %96 {strides = array<i32>} : memref<16x16xf32, #tpu.memory_space<vmem>>, vector<16x16xf32>,
    return
  }
  func.func @transform_0(%arg0: i32) -> (i32, i32, i32) {
    %c0_i32 = arith.constant 0 : i32
    %c0_i32_0 = arith.constant 0 : i32
    %c0_i32_1 = arith.constant 0 : i32
    %c0_i32_2 = arith.constant 0 : i32
    return %c0_i32, %c0_i32_0, %c0_i32_1 : i32, i32, i32
  }
  func.func @transform_1(%arg0: i32) -> (i32, i32, i32) {
    %c0_i32 = arith.constant 0 : i32
    %c0_i32_0 = arith.constant 0 : i32
    %c0_i32_1 = arith.constant 0 : i32
    return %c0_i32, %arg0, %c0_i32_0 : i32, i32, i32
  }
  func.func @transform_2(%arg0: i32) -> (i32, i32) {
    %c0_i32 = arith.constant 0 : i32
    %c0_i32_0 = arith.constant 0 : i32
    return %arg0, %c0_i32 : i32, i32
  }
  func.func @transform_3(%arg0: i32) -> (i32, i32, i32) {
    %c0_i32 = arith.constant 0 : i32
    %c0_i32_0 = arith.constant 0 : i32
    %c0_i32_1 = arith.constant 0 : i32
    return %arg0, %c0_i32, %c0_i32_0 : i32, i32, i32
  }
  func.func @transform_4(%arg0: i32) -> (i32, i32, i32) {
    %c0_i32 = arith.constant 0 : i32
    %c0_i32_0 = arith.constant 0 : i32
    %c0_i32_1 = arith.constant 0 : i32
    %c0_i32_2 = arith.constant 0 : i32
    return %c0_i32, %c0_i32_0, %c0_i32_1 : i32, i32, i32
  }
  func.func @transform_5(%arg0: i32) -> (i32, i32, i32) {
    %c0_i32 = arith.constant 0 : i32
    %c0_i32_0 = arith.constant 0 : i32
    %c0_i32_1 = arith.constant 0 : i32
    %c0_i32_2 = arith.constant 0 : i32
    return %c0_i32, %c0_i32_0, %c0_i32_1 : i32, i32, i32
  }
  func.func @transform_6(%arg0: i32) -> (i32, i32) {
    %c0_i32 = arith.constant 0 : i32
    %c0_i32_0 = arith.constant 0 : i32
    %c0_i32_1 = arith.constant 0 : i32
    return %c0_i32, %c0_i32_0 : i32, i32
  }
  func.func @transform_7(%arg0: i32) -> (i32, i32) {
    %c0_i32 = arith.constant 0 : i32
    %c0_i32_0 = arith.constant 0 : i32
    return %arg0, %c0_i32 : i32, i32
  }
}

</mosaic_0001>

<llo_original>
// kernel: encoder_forward.3
$region0: #{encoder_forward.3}
  #allocation0 [shape = 'u32[]', space=smem, size = 0x4, offset = 0x4, fixed_abs, tag = 'smem constant byte address 0x4 - core index']
  #allocation1 [shape = 'u32[144,128]{1,0:T(1,128)}', space=vmem, size = 0x12000, scoped, tag = 'internal scratch']
  %s0 = inlined_call_operand.vmem [shape: f32[2,16,16], index: 0, kind: input, shape index: {}]
  %s1 = inlined_call_operand.vmem [shape: f32[2,16,16], index: 1, kind: input, shape index: {}]
  %s2 = inlined_call_operand.vmem [shape: f32[16,16], index: 2, kind: input, shape index: {}]
  %s3 = inlined_call_operand.vmem [shape: f32[16,16,9], index: 3, kind: input, shape index: {}]
  %s4 = inlined_call_operand.vmem [shape: f32[2,9,16], index: 4, kind: input, shape index: {}]
  %s5 = inlined_call_operand.vmem [shape: f32[2,1,16], index: 5, kind: input, shape index: {}]
  %s6 = inlined_call_operand.vmem [shape: f32[1,16], index: 6, kind: input, shape index: {}]
  %s7 = inlined_call_operand.vmem [shape: f32[16,16], index: 7, kind: output, shape index: {}]
  %s8 = sld [smem:[#allocation0]]
  $region38: #{encoder_forward.3} parent=0
    _
  %s10 = ssub.s32 1, %s8
  %s11 = scalar_select 0, %s10, %s8
  // Predicated region
  $region2: #{encoder_forward.3} parent=0 // pred_check
    _
  $region3: #{encoder_forward.3} parent=0 // pred_check_branch
    %13 = sbr.rel (0) target = $region5
  $region4: #{encoder_forward.3} parent=0 // pred_region
    _
  $region5: #{encoder_forward.3} parent=0 // pred_fallthru
    _
  // Predicated region
  $region6: #{encoder_forward.3} parent=0 // pred_check
    _
  $region7: #{encoder_forward.3} parent=0 // pred_check_branch
    %15 = sbr.rel (0) target = $region9
  $region8: #{encoder_forward.3} parent=0 // pred_region
    _
  $region9: #{encoder_forward.3} parent=0 // pred_fallthru
    _
  // Predicated region
  $region10: #{encoder_forward.3} parent=0 // pred_check
    _
  $region11: #{encoder_forward.3} parent=0 // pred_check_branch
    %17 = sbr.rel (0) target = $region13
  $region12: #{encoder_forward.3} parent=0 // pred_region
    _
  $region13: #{encoder_forward.3} parent=0 // pred_fallthru
    _
  // Predicated region
  $region14: #{encoder_forward.3} parent=0 // pred_check
    _
  $region15: #{encoder_forward.3} parent=0 // pred_check_branch
    %19 = sbr.rel (0) target = $region17
  $region16: #{encoder_forward.3} parent=0 // pred_region
    _
  $region17: #{encoder_forward.3} parent=0 // pred_fallthru
    _
  // Predicated region
  $region18: #{encoder_forward.3} parent=0 // pred_check
    _
  $region19: #{encoder_forward.3} parent=0 // pred_check_branch
    %21 = sbr.rel (0) target = $region21
  $region20: #{encoder_forward.3} parent=0 // pred_region
    _
  $region21: #{encoder_forward.3} parent=0 // pred_fallthru
    _
  // Predicated region
  $region22: #{encoder_forward.3} parent=0 // pred_check
    _
  $region23: #{encoder_forward.3} parent=0 // pred_check_branch
    %23 = sbr.rel (0) target = $region25
  $region24: #{encoder_forward.3} parent=0 // pred_region
    _
  $region25: #{encoder_forward.3} parent=0 // pred_fallthru
    _
  // Predicated region
  $region26: #{encoder_forward.3} parent=0 // pred_check
    _
  $region27: #{encoder_forward.3} parent=0 // pred_check_branch
    %25 = sbr.rel (0) target = $region29
  $region28: #{encoder_forward.3} parent=0 // pred_region
    _
  $region29: #{encoder_forward.3} parent=0 // pred_fallthru
    _
  %v26 = vld [vmem:[%s2] sm:$0xff]
  %v27 = vld [vmem:[%s2 + $0x8] sm:$0xff]
  %vm28 = vcmp.gt.f32.partialorder %v26, 0.0
  %vm29 = vcmp.gt.f32.partialorder %v27, 0.0
  %v30 = vld [vmem:[%s3] sm:$0xff]
  %v31 = vld [vmem:[%s3 + $0x8] sm:$0xff]
  %v32 = vld [vmem:[%s3 + $0x10] sm:$0xff]
  %v33 = vld [vmem:[%s3 + $0x18] sm:$0xff]
  %v34 = vld [vmem:[%s3 + $0x20] sm:$0xff]
  %v35 = vld [vmem:[%s3 + $0x28] sm:$0xff]
  %v36 = vld [vmem:[%s3 + $0x30] sm:$0xff]
  %v37 = vld [vmem:[%s3 + $0x38] sm:$0xff]
  %v38 = vld [vmem:[%s3 + $0x40] sm:$0xff]
  %v39 = vld [vmem:[%s3 + $0x48] sm:$0xff]
  %v40 = vld [vmem:[%s3 + $0x50] sm:$0xff]
  %v41 = vld [vmem:[%s3 + $0x58] sm:$0xff]
  %v42 = vld [vmem:[%s3 + $0x60] sm:$0xff]
  %v43 = vld [vmem:[%s3 + $0x68] sm:$0xff]
  %v44 = vld [vmem:[%s3 + $0x70] sm:$0xff]
  %v45 = vld [vmem:[%s3 + $0x78] sm:$0xff]
  %v46 = vld [vmem:[%s3 + $0x80] sm:$0xff]
  %v47 = vld [vmem:[%s3 + $0x88] sm:$0xff]
  %v48 = vld [vmem:[%s3 + $0x90] sm:$0xff]
  %v49 = vld [vmem:[%s3 + $0x98] sm:$0xff]
  %v50 = vld [vmem:[%s3 + $0xa0] sm:$0xff]
  %v51 = vld [vmem:[%s3 + $0xa8] sm:$0xff]
  %v52 = vld [vmem:[%s3 + $0xb0] sm:$0xff]
  %v53 = vld [vmem:[%s3 + $0xb8] sm:$0xff]
  %v54 = vld [vmem:[%s3 + $0xc0] sm:$0xff]
  %v55 = vld [vmem:[%s3 + $0xc8] sm:$0xff]
  %v56 = vld [vmem:[%s3 + $0xd0] sm:$0xff]
  %v57 = vld [vmem:[%s3 + $0xd8] sm:$0xff]
  %v58 = vld [vmem:[%s3 + $0xe0] sm:$0xff]
  %v59 = vld [vmem:[%s3 + $0xe8] sm:$0xff]
  %v60 = vld [vmem:[%s3 + $0xf0] sm:$0xff]
  %v61 = vld [vmem:[%s3 + $0xf8] sm:$0xff]
  %v62 = vld [vmem:[%s0] sm:$0xff]
  %v63 = vld [vmem:[%s0 + $0x8] sm:$0xff]
  %v64 = vld [vmem:[%s1] sm:$0xff]
  %v65 = vld [vmem:[%s1 + $0x8] sm:$0xff]
  %v66 = vld [vmem:[%s4] sm:$0xff]
  %v67 = vld [vmem:[%s4 + $0x8] sm:$0x1]
  %vm68 = vcmask 72704
  %v70 = vsel %vm68, %v30, 0
  %v73 = vsel %vm68, %v31, 0
  %v76 = vsel %vm68, %v32, 0
  %v79 = vsel %vm68, %v33, 0
  %v82 = vsel %vm68, %v34, 0
  %v85 = vsel %vm68, %v35, 0
  %v88 = vsel %vm68, %v36, 0
  %v91 = vsel %vm68, %v37, 0
  %v94 = vsel %vm68, %v38, 0
  %v97 = vsel %vm68, %v39, 0
  %v100 = vsel %vm68, %v40, 0
  %v103 = vsel %vm68, %v41, 0
  %v106 = vsel %vm68, %v42, 0
  %v109 = vsel %vm68, %v43, 0
  %v112 = vsel %vm68, %v44, 0
  %v115 = vsel %vm68, %v45, 0
  %v118 = vsel %vm68, %v46, 0
  %v121 = vsel %vm68, %v47, 0
  %v124 = vsel %vm68, %v48, 0
  %v127 = vsel %vm68, %v49, 0
  %v130 = vsel %vm68, %v50, 0
  %v133 = vsel %vm68, %v51, 0
  %v136 = vsel %vm68, %v52, 0
  %v139 = vsel %vm68, %v53, 0
  %v142 = vsel %vm68, %v54, 0
  %v145 = vsel %vm68, %v55, 0
  %v148 = vsel %vm68, %v56, 0
  %v151 = vsel %vm68, %v57, 0
  %v154 = vsel %vm68, %v58, 0
  %v157 = vsel %vm68, %v59, 0
  %v160 = vsel %vm68, %v60, 0
  %v163 = vsel %vm68, %v61, 0
  %vm165 = vcmask 1040384
  %v167 = vsel %vm165, %v67, 0
  %169 = vmatprep.subr.mxu0 0.0
  %170 = vmatpush1.msra.mxu0 0.0
  %171 = vmatprep.subr.mxu0 0.0
  %172 = vmatpush1.msra.mxu0 0.0
  %173 = vmatprep.subr.mxu0 0.0
  %174 = vmatpush1.msra.mxu0 0.0
  %175 = vmatprep.subr.mxu0 0.0
  %176 = vmatpush1.msra.mxu0 0.0
  %177 = vmatprep.subr.mxu0 0.0
  %178 = vmatpush1.msra.mxu0 0.0
  %179 = vmatprep.subr.mxu0 0.0
  %180 = vmatpush1.msra.mxu0 0.0
  %181 = vmatprep.subr.mxu0 0.0
  %182 = vmatpush1.msra.mxu0 0.0
  %183 = vmatprep.subr.mxu0 0.0
  %184 = vmatpush1.msra.mxu0 0.0
  %185 = vmatprep.subr.mxu0 0.0
  %186 = vmatpush1.msra.mxu0 0.0
  %187 = vmatprep.subr.mxu0 0.0
  %188 = vmatpush1.msra.mxu0 0.0
  %189 = vmatprep.subr.mxu0 0.0
  %190 = vmatpush1.msra.mxu0 0.0
  %191 = vmatprep.subr.mxu0 0.0
  %192 = vmatpush1.msra.mxu0 0.0
  %193 = vmatprep.subr.mxu0 0.0
  %194 = vmatpush1.msra.mxu0 0.0
  %195 = vmatprep.subr.mxu0 0.0
  %196 = vmatpush1.msra.mxu0 0.0
  %197 = vmatprep.subr.mxu0 0.0
  %198 = vmatpush1.msra.mxu0 %v167
  %199 = vmatprep.subr.mxu0 0.0
  %200 = vmatpush1.msra.mxu0 %v66
  %201 = vmatprep.subr.mxu0 0.0
  %202 = vmatpush2.msra.mxu0 0.0
  %203 = vmatprep.subr.mxu0 0.0
  %204 = vmatpush2.msra.mxu0 0.0
  %205 = vmatprep.subr.mxu0 0.0
  %206 = vmatpush2.msra.mxu0 0.0
  %207 = vmatprep.subr.mxu0 0.0
  %208 = vmatpush2.msra.mxu0 0.0
  %209 = vmatprep.subr.mxu0 0.0
  %210 = vmatpush2.msra.mxu0 0.0
  %211 = vmatprep.subr.mxu0 0.0
  %212 = vmatpush2.msra.mxu0 0.0
  %213 = vmatprep.subr.mxu0 0.0
  %214 = vmatpush2.msra.mxu0 0.0
  %215 = vmatprep.subr.mxu0 0.0
  %216 = vmatpush2.msra.mxu0 0.0
  %217 = vmatprep.subr.mxu0 0.0
  %218 = vmatpush2.msra.mxu0 0.0
  %219 = vmatprep.subr.mxu0 0.0
  %220 = vmatpush2.msra.mxu0 0.0
  %221 = vmatprep.subr.mxu0 0.0
  %222 = vmatpush2.msra.mxu0 0.0
  %223 = vmatprep.subr.mxu0 0.0
  %224 = vmatpush2.msra.mxu0 0.0
  %225 = vmatprep.subr.mxu0 0.0
  %226 = vmatpush2.msra.mxu0 0.0
  %227 = vmatprep.subr.mxu0 0.0
  %228 = vmatpush2.msra.mxu0 0.0
  %229 = vmatprep.subr.mxu0 0.0
  %230 = vmatpush2.msra.mxu0 0.0
  %231 = vmatprep.subr.mxu0 0.0
  %232 = vmatpush2.msra.mxu0 0.0
  %233 = vmatprep.mubr.f32.mxu0 0.0
  %234 = vmatmul.mubr.f32.gmra.mxu0 %v70
  %v235 = vpop.f32.mrf.mxu0
  %v236 = vadd.f32 0.0, %v235
  %v237 = vpop.f32.mrf.mxu0
  %238 = vmatprep.mubr.f32.mxu0 0.0
  %239 = vmatmul.mubr.f32.gmra.mxu0 %v73
  %v240 = vpop.f32.mrf.mxu0
  %v241 = vadd.f32 0.0, %v240
  %v242 = vpop.f32.mrf.mxu0
  %243 = vmatprep.mubr.f32.mxu0 0.0
  %244 = vmatmul.mubr.f32.gmra.mxu0 %v76
  %v245 = vpop.f32.mrf.mxu0
  %v246 = vadd.f32 0.0, %v245
  %v247 = vpop.f32.mrf.mxu0
  %248 = vmatprep.mubr.f32.mxu0 0.0
  %249 = vmatmul.mubr.f32.gmra.mxu0 %v79
  %v250 = vpop.f32.mrf.mxu0
  %v251 = vadd.f32 0.0, %v250
  %v252 = vpop.f32.mrf.mxu0
  %253 = vmatprep.mubr.f32.mxu0 0.0
  %254 = vmatmul.mubr.f32.gmra.mxu0 %v82
  %v255 = vpop.f32.mrf.mxu0
  %v256 = vadd.f32 0.0, %v255
  %v257 = vpop.f32.mrf.mxu0
  %258 = vmatprep.mubr.f32.mxu0 0.0
  %259 = vmatmul.mubr.f32.gmra.mxu0 %v85
  %v260 = vpop.f32.mrf.mxu0
  %v261 = vadd.f32 0.0, %v260
  %v262 = vpop.f32.mrf.mxu0
  %263 = vmatprep.mubr.f32.mxu0 0.0
  %264 = vmatmul.mubr.f32.gmra.mxu0 %v88
  %v265 = vpop.f32.mrf.mxu0
  %v266 = vadd.f32 0.0, %v265
  %v267 = vpop.f32.mrf.mxu0
  %268 = vmatprep.mubr.f32.mxu0 0.0
  %269 = vmatmul.mubr.f32.gmra.mxu0 %v91
  %v270 = vpop.f32.mrf.mxu0
  %v271 = vadd.f32 0.0, %v270
  %v272 = vpop.f32.mrf.mxu0
  %273 = vmatprep.mubr.f32.mxu0 0.0
  %274 = vmatmul.mubr.f32.gmra.mxu0 %v94
  %v275 = vpop.f32.mrf.mxu0
  %v276 = vadd.f32 0.0, %v275
  %v277 = vpop.f32.mrf.mxu0
  %278 = vmatprep.mubr.f32.mxu0 0.0
  %279 = vmatmul.mubr.f32.gmra.mxu0 %v97
  %v280 = vpop.f32.mrf.mxu0
  %v281 = vadd.f32 0.0, %v280
  %v282 = vpop.f32.mrf.mxu0
  %283 = vmatprep.mubr.f32.mxu0 0.0
  %284 = vmatmul.mubr.f32.gmra.mxu0 %v100
  %v285 = vpop.f32.mrf.mxu0
  %v286 = vadd.f32 0.0, %v285
  %v287 = vpop.f32.mrf.mxu0
  %288 = vmatprep.mubr.f32.mxu0 0.0
  %289 = vmatmul.mubr.f32.gmra.mxu0 %v103
  %v290 = vpop.f32.mrf.mxu0
  %v291 = vadd.f32 0.0, %v290
  %v292 = vpop.f32.mrf.mxu0
  %293 = vmatprep.mubr.f32.mxu0 0.0
  %294 = vmatmul.mubr.f32.gmra.mxu0 %v106
  %v295 = vpop.f32.mrf.mxu0
  %v296 = vadd.f32 0.0, %v295
  %v297 = vpop.f32.mrf.mxu0
  %298 = vmatprep.mubr.f32.mxu0 0.0
  %299 = vmatmul.mubr.f32.gmra.mxu0 %v109
  %v300 = vpop.f32.mrf.mxu0
  %v301 = vadd.f32 0.0, %v300
  %v302 = vpop.f32.mrf.mxu0
  %303 = vmatprep.mubr.f32.mxu0 0.0
  %304 = vmatmul.mubr.f32.gmra.mxu0 %v112
  %v305 = vpop.f32.mrf.mxu0
  %v306 = vadd.f32 0.0, %v305
  %v307 = vpop.f32.mrf.mxu0
  %308 = vmatprep.mubr.f32.mxu0 0.0
  %309 = vmatmul.mubr.f32.gmra.mxu0 %v115
  %v310 = vpop.f32.mrf.mxu0
  %v311 = vadd.f32 0.0, %v310
  %v312 = vpop.f32.mrf.mxu0
  %313 = vmatprep.mubr.f32.mxu0 0.0
  %314 = vmatmul.mubr.f32.gmra.mxu0 %v118
  %v315 = vpop.f32.mrf.mxu0
  %v316 = vadd.f32 0.0, %v315
  %v317 = vpop.f32.mrf.mxu0
  %318 = vmatprep.mubr.f32.mxu0 0.0
  %319 = vmatmul.mubr.f32.gmra.mxu0 %v121
  %v320 = vpop.f32.mrf.mxu0
  %v321 = vadd.f32 0.0, %v320
  %v322 = vpop.f32.mrf.mxu0
  %323 = vmatprep.mubr.f32.mxu0 0.0
  %324 = vmatmul.mubr.f32.gmra.mxu0 %v124
  %v325 = vpop.f32.mrf.mxu0
  %v326 = vadd.f32 0.0, %v325
  %v327 = vpop.f32.mrf.mxu0
  %328 = vmatprep.mubr.f32.mxu0 0.0
  %329 = vmatmul.mubr.f32.gmra.mxu0 %v127
  %v330 = vpop.f32.mrf.mxu0
  %v331 = vadd.f32 0.0, %v330
  %v332 = vpop.f32.mrf.mxu0
  %333 = vmatprep.mubr.f32.mxu0 0.0
  %334 = vmatmul.mubr.f32.gmra.mxu0 %v130
  %v335 = vpop.f32.mrf.mxu0
  %v336 = vadd.f32 0.0, %v335
  %v337 = vpop.f32.mrf.mxu0
  %338 = vmatprep.mubr.f32.mxu0 0.0
  %339 = vmatmul.mubr.f32.gmra.mxu0 %v133
  %v340 = vpop.f32.mrf.mxu0
  %v341 = vadd.f32 0.0, %v340
  %v342 = vpop.f32.mrf.mxu0
  %343 = vmatprep.mubr.f32.mxu0 0.0
  %344 = vmatmul.mubr.f32.gmra.mxu0 %v136
  %v345 = vpop.f32.mrf.mxu0
  %v346 = vadd.f32 0.0, %v345
  %v347 = vpop.f32.mrf.mxu0
  %348 = vmatprep.mubr.f32.mxu0 0.0
  %349 = vmatmul.mubr.f32.gmra.mxu0 %v139
  %v350 = vpop.f32.mrf.mxu0
  %v351 = vadd.f32 0.0, %v350
  %v352 = vpop.f32.mrf.mxu0
  %353 = vmatprep.mubr.f32.mxu0 0.0
  %354 = vmatmul.mubr.f32.gmra.mxu0 %v142
  %v355 = vpop.f32.mrf.mxu0
  %v356 = vadd.f32 0.0, %v355
  %v357 = vpop.f32.mrf.mxu0
  %358 = vmatprep.mubr.f32.mxu0 0.0
  %359 = vmatmul.mubr.f32.gmra.mxu0 %v145
  %v360 = vpop.f32.mrf.mxu0
  %v361 = vadd.f32 0.0, %v360
  %v362 = vpop.f32.mrf.mxu0
  %363 = vmatprep.mubr.f32.mxu0 0.0
  %364 = vmatmul.mubr.f32.gmra.mxu0 %v148
  %v365 = vpop.f32.mrf.mxu0
  %v366 = vadd.f32 0.0, %v365
  %v367 = vpop.f32.mrf.mxu0
  %368 = vmatprep.mubr.f32.mxu0 0.0
  %369 = vmatmul.mubr.f32.gmra.mxu0 %v151
  %v370 = vpop.f32.mrf.mxu0
  %v371 = vadd.f32 0.0, %v370
  %v372 = vpop.f32.mrf.mxu0
  %373 = vmatprep.mubr.f32.mxu0 0.0
  %374 = vmatmul.mubr.f32.gmra.mxu0 %v154
  %v375 = vpop.f32.mrf.mxu0
  %v376 = vadd.f32 0.0, %v375
  %v377 = vpop.f32.mrf.mxu0
  %378 = vmatprep.mubr.f32.mxu0 0.0
  %379 = vmatmul.mubr.f32.gmra.mxu0 %v157
  %v380 = vpop.f32.mrf.mxu0
  %v381 = vadd.f32 0.0, %v380
  %v382 = vpop.f32.mrf.mxu0
  %383 = vmatprep.mubr.f32.mxu0 0.0
  %384 = vmatmul.mubr.f32.gmra.mxu0 %v160
  %v385 = vpop.f32.mrf.mxu0
  %v386 = vadd.f32 0.0, %v385
  %v387 = vpop.f32.mrf.mxu0
  %388 = vmatprep.mubr.f32.mxu0 0.0
  %389 = vmatmul.mubr.f32.gmra.mxu0 %v163
  %v390 = vpop.f32.mrf.mxu0
  %v391 = vadd.f32 0.0, %v390
  %v392 = vpop.f32.mrf.mxu0
  %393 = vdwg.mxu0
  %v394 = vadd.f32 %v236, %v62
  %v395 = vadd.f32 %v241, %v63
  %v396 = vadd.f32 %v246, %v62
  %v397 = vadd.f32 %v251, %v63
  %v398 = vadd.f32 %v256, %v62
  %v399 = vadd.f32 %v261, %v63
  %v400 = vadd.f32 %v266, %v62
  %v401 = vadd.f32 %v271, %v63
  %v402 = vadd.f32 %v276, %v62
  %v403 = vadd.f32 %v281, %v63
  %v404 = vadd.f32 %v286, %v62
  %v405 = vadd.f32 %v291, %v63
  %v406 = vadd.f32 %v296, %v62
  %v407 = vadd.f32 %v301, %v63
  %v408 = vadd.f32 %v306, %v62
  %v409 = vadd.f32 %v311, %v63
  %v410 = vadd.f32 %v316, %v62
  %v411 = vadd.f32 %v321, %v63
  %v412 = vadd.f32 %v326, %v62
  %v413 = vadd.f32 %v331, %v63
  %v414 = vadd.f32 %v336, %v62
  %v415 = vadd.f32 %v341, %v63
  %v416 = vadd.f32 %v346, %v62
  %v417 = vadd.f32 %v351, %v63
  %v418 = vadd.f32 %v356, %v62
  %v419 = vadd.f32 %v361, %v63
  %v420 = vadd.f32 %v366, %v62
  %v421 = vadd.f32 %v371, %v63
  %v422 = vadd.f32 %v376, %v62
  %v423 = vadd.f32 %v381, %v63
  %v424 = vadd.f32 %v386, %v62
  %v425 = vadd.f32 %v391, %v63
  %v428 = vcombine.high %v64, %v64
  %v430 = vunpack.c.l.s4 1966171168
  %v431 = vunpack.c.0.s8 %v430
  %v432 = vlaneseq
  %v433 = vshrl.u32 %v432, 7
  %v434 = vsub.s32 %v431, %v433
  %v435 = vrot.slane %v64, %v434
  %v437 = vunpack.c.l.s4 1966171168
  %v438 = vunpack.c.0.s8 %v437
  %v439 = vlaneseq
  %v440 = vshrl.u32 %v439, 7
  %v441 = vsub.s32 %v438, %v440
  %v442 = vrot.slane %v428, %v441
  %v443 = vcombine.high %v435, %v435
  %v444 = vcombine.high %v442, %v442
  %v446 = vunpack.c.l.s4 1966171168
  %v447 = vunpack.c.0.s8 %v446
  %v448 = vlaneseq
  %v449 = vshrl.u32 %v448, 7
  %v450 = vsub.s32 %v447, %v449
  %v451 = vrot.slane %v435, %v450
  %v453 = vunpack.c.l.s4 1966171168
  %v454 = vunpack.c.0.s8 %v453
  %v455 = vlaneseq
  %v456 = vshrl.u32 %v455, 7
  %v457 = vsub.s32 %v454, %v456
  %v458 = vrot.slane %v442, %v457
  %v460 = vunpack.c.l.s4 1966171168
  %v461 = vunpack.c.0.s8 %v460
  %v462 = vlaneseq
  %v463 = vshrl.u32 %v462, 7
  %v464 = vsub.s32 %v461, %v463
  %v465 = vrot.slane %v443, %v464
  %v467 = vunpack.c.l.s4 1966171168
  %v468 = vunpack.c.0.s8 %v467
  %v469 = vlaneseq
  %v470 = vshrl.u32 %v469, 7
  %v471 = vsub.s32 %v468, %v470
  %v472 = vrot.slane %v444, %v471
  %v473 = vcombine.high %v451, %v451
  %v474 = vcombine.high %v458, %v458
  %v475 = vcombine.high %v465, %v465
  %v476 = vcombine.high %v472, %v472
  %v477 = vcombine.high %v65, %v65
  %v479 = vunpack.c.l.s4 1966171168
  %v480 = vunpack.c.0.s8 %v479
  %v481 = vlaneseq
  %v482 = vshrl.u32 %v481, 7
  %v483 = vsub.s32 %v480, %v482
  %v484 = vrot.slane %v65, %v483
  %v486 = vunpack.c.l.s4 1966171168
  %v487 = vunpack.c.0.s8 %v486
  %v488 = vlaneseq
  %v489 = vshrl.u32 %v488, 7
  %v490 = vsub.s32 %v487, %v489
  %v491 = vrot.slane %v477, %v490
  %v492 = vcombine.high %v484, %v484
  %v493 = vcombine.high %v491, %v491
  %v495 = vunpack.c.l.s4 1966171168
  %v496 = vunpack.c.0.s8 %v495
  %v497 = vlaneseq
  %v498 = vshrl.u32 %v497, 7
  %v499 = vsub.s32 %v496, %v498
  %v500 = vrot.slane %v484, %v499
  %v502 = vunpack.c.l.s4 1966171168
  %v503 = vunpack.c.0.s8 %v502
  %v504 = vlaneseq
  %v505 = vshrl.u32 %v504, 7
  %v506 = vsub.s32 %v503, %v505
  %v507 = vrot.slane %v491, %v506
  %v509 = vunpack.c.l.s4 1966171168
  %v510 = vunpack.c.0.s8 %v509
  %v511 = vlaneseq
  %v512 = vshrl.u32 %v511, 7
  %v513 = vsub.s32 %v510, %v512
  %v514 = vrot.slane %v492, %v513
  %v516 = vunpack.c.l.s4 1966171168
  %v517 = vunpack.c.0.s8 %v516
  %v518 = vlaneseq
  %v519 = vshrl.u32 %v518, 7
  %v520 = vsub.s32 %v517, %v519
  %v521 = vrot.slane %v493, %v520
  %v522 = vcombine.high %v500, %v500
  %v523 = vcombine.high %v507, %v507
  %v524 = vcombine.high %v514, %v514
  %v525 = vcombine.high %v521, %v521
  %v526 = vlaneseq
  %v527 = vshrl.u32 %v526, 7
  %v528 = vsub.s32 0, %v527
  %v529 = vrot.slane %v451, %v528
  %v530 = vlaneseq
  %v531 = vshrl.u32 %v530, 7
  %v532 = vsub.s32 0, %v531
  %v533 = vrot.slane %v465, %v532
  %v534 = vlaneseq
  %v535 = vshrl.u32 %v534, 7
  %v536 = vsub.s32 0, %v535
  %v537 = vrot.slane %v473, %v536
  %v538 = vlaneseq
  %v539 = vshrl.u32 %v538, 7
  %v540 = vsub.s32 0, %v539
  %v541 = vrot.slane %v475, %v540
  %v542 = vlaneseq
  %v543 = vshrl.u32 %v542, 7
  %v544 = vsub.s32 0, %v543
  %v545 = vrot.slane %v458, %v544
  %v546 = vlaneseq
  %v547 = vshrl.u32 %v546, 7
  %v548 = vsub.s32 0, %v547
  %v549 = vrot.slane %v472, %v548
  %v550 = vlaneseq
  %v551 = vshrl.u32 %v550, 7
  %v552 = vsub.s32 0, %v551
  %v553 = vrot.slane %v474, %v552
  %v554 = vlaneseq
  %v555 = vshrl.u32 %v554, 7
  %v556 = vsub.s32 0, %v555
  %v557 = vrot.slane %v476, %v556
  %v558 = vlaneseq
  %v559 = vshrl.u32 %v558, 7
  %v560 = vsub.s32 0, %v559
  %v561 = vrot.slane %v500, %v560
  %v562 = vlaneseq
  %v563 = vshrl.u32 %v562, 7
  %v564 = vsub.s32 0, %v563
  %v565 = vrot.slane %v514, %v564
  %v566 = vlaneseq
  %v567 = vshrl.u32 %v566, 7
  %v568 = vsub.s32 0, %v567
  %v569 = vrot.slane %v522, %v568
  %v570 = vlaneseq
  %v571 = vshrl.u32 %v570, 7
  %v572 = vsub.s32 0, %v571
  %v573 = vrot.slane %v524, %v572
  %v574 = vlaneseq
  %v575 = vshrl.u32 %v574, 7
  %v576 = vsub.s32 0, %v575
  %v577 = vrot.slane %v507, %v576
  %v578 = vlaneseq
  %v579 = vshrl.u32 %v578, 7
  %v580 = vsub.s32 0, %v579
  %v581 = vrot.slane %v521, %v580
  %v582 = vlaneseq
  %v583 = vshrl.u32 %v582, 7
  %v584 = vsub.s32 0, %v583
  %v585 = vrot.slane %v523, %v584
  %v586 = vlaneseq
  %v587 = vshrl.u32 %v586, 7
  %v588 = vsub.s32 0, %v587
  %v589 = vrot.slane %v525, %v588
  %v606 = vadd.f32 %v394, %v529
  %v607 = vadd.f32 %v395, %v529
  %v608 = vadd.f32 %v396, %v533
  %v609 = vadd.f32 %v397, %v533
  %v610 = vadd.f32 %v398, %v537
  %v611 = vadd.f32 %v399, %v537
  %v612 = vadd.f32 %v400, %v541
  %v613 = vadd.f32 %v401, %v541
  %v614 = vadd.f32 %v402, %v545
  %v615 = vadd.f32 %v403, %v545
  %v616 = vadd.f32 %v404, %v549
  %v617 = vadd.f32 %v405, %v549
  %v618 = vadd.f32 %v406, %v553
  %v619 = vadd.f32 %v407, %v553
  %v620 = vadd.f32 %v408, %v557
  %v621 = vadd.f32 %v409, %v557
  %v622 = vadd.f32 %v410, %v561
  %v623 = vadd.f32 %v411, %v561
  %v624 = vadd.f32 %v412, %v565
  %v625 = vadd.f32 %v413, %v565
  %v626 = vadd.f32 %v414, %v569
  %v627 = vadd.f32 %v415, %v569
  %v628 = vadd.f32 %v416, %v573
  %v629 = vadd.f32 %v417, %v573
  %v630 = vadd.f32 %v418, %v577
  %v631 = vadd.f32 %v419, %v577
  %v632 = vadd.f32 %v420, %v581
  %v633 = vadd.f32 %v421, %v581
  %v634 = vadd.f32 %v422, %v585
  %v635 = vadd.f32 %v423, %v585
  %v636 = vadd.f32 %v424, %v589
  %v637 = vadd.f32 %v425, %v589
  %vm638 = vcmp.ge.f32.partialorder %v606, 0.0
  %vm639 = vcmp.ge.f32.partialorder %v607, 0.0
  %vm640 = vcmp.ge.f32.partialorder %v608, 0.0
  %vm641 = vcmp.ge.f32.partialorder %v609, 0.0
  %vm642 = vcmp.ge.f32.partialorder %v610, 0.0
  %vm643 = vcmp.ge.f32.partialorder %v611, 0.0
  %vm644 = vcmp.ge.f32.partialorder %v612, 0.0
  %vm645 = vcmp.ge.f32.partialorder %v613, 0.0
  %vm646 = vcmp.ge.f32.partialorder %v614, 0.0
  %vm647 = vcmp.ge.f32.partialorder %v615, 0.0
  %vm648 = vcmp.ge.f32.partialorder %v616, 0.0
  %vm649 = vcmp.ge.f32.partialorder %v617, 0.0
  %vm650 = vcmp.ge.f32.partialorder %v618, 0.0
  %vm651 = vcmp.ge.f32.partialorder %v619, 0.0
  %vm652 = vcmp.ge.f32.partialorder %v620, 0.0
  %vm653 = vcmp.ge.f32.partialorder %v621, 0.0
  %vm654 = vcmp.ge.f32.partialorder %v622, 0.0
  %vm655 = vcmp.ge.f32.partialorder %v623, 0.0
  %vm656 = vcmp.ge.f32.partialorder %v624, 0.0
  %vm657 = vcmp.ge.f32.partialorder %v625, 0.0
  %vm658 = vcmp.ge.f32.partialorder %v626, 0.0
  %vm659 = vcmp.ge.f32.partialorder %v627, 0.0
  %vm660 = vcmp.ge.f32.partialorder %v628, 0.0
  %vm661 = vcmp.ge.f32.partialorder %v629, 0.0
  %vm662 = vcmp.ge.f32.partialorder %v630, 0.0
  %vm663 = vcmp.ge.f32.partialorder %v631, 0.0
  %vm664 = vcmp.ge.f32.partialorder %v632, 0.0
  %vm665 = vcmp.ge.f32.partialorder %v633, 0.0
  %vm666 = vcmp.ge.f32.partialorder %v634, 0.0
  %vm667 = vcmp.ge.f32.partialorder %v635, 0.0
  %vm668 = vcmp.ge.f32.partialorder %v636, 0.0
  %vm669 = vcmp.ge.f32.partialorder %v637, 0.0
  %v670 = vmul.f32 %v606, 0.2
  %v671 = vmul.f32 %v607, 0.2
  %v672 = vmul.f32 %v608, 0.2
  %v673 = vmul.f32 %v609, 0.2
  %v674 = vmul.f32 %v610, 0.2
  %v675 = vmul.f32 %v611, 0.2
  %v676 = vmul.f32 %v612, 0.2
  %v677 = vmul.f32 %v613, 0.2
  %v678 = vmul.f32 %v614, 0.2
  %v679 = vmul.f32 %v615, 0.2
  %v680 = vmul.f32 %v616, 0.2
  %v681 = vmul.f32 %v617, 0.2
  %v682 = vmul.f32 %v618, 0.2
  %v683 = vmul.f32 %v619, 0.2
  %v684 = vmul.f32 %v620, 0.2
  %v685 = vmul.f32 %v621, 0.2
  %v686 = vmul.f32 %v622, 0.2
  %v687 = vmul.f32 %v623, 0.2
  %v688 = vmul.f32 %v624, 0.2
  %v689 = vmul.f32 %v625, 0.2
  %v690 = vmul.f32 %v626, 0.2
  %v691 = vmul.f32 %v627, 0.2
  %v692 = vmul.f32 %v628, 0.2
  %v693 = vmul.f32 %v629, 0.2
  %v694 = vmul.f32 %v630, 0.2
  %v695 = vmul.f32 %v631, 0.2
  %v696 = vmul.f32 %v632, 0.2
  %v697 = vmul.f32 %v633, 0.2
  %v698 = vmul.f32 %v634, 0.2
  %v699 = vmul.f32 %v635, 0.2
  %v700 = vmul.f32 %v636, 0.2
  %v701 = vmul.f32 %v637, 0.2
  %v702 = vsel %vm638, %v606, %v670
  %v703 = vsel %vm639, %v607, %v671
  %v704 = vsel %vm640, %v608, %v672
  %v705 = vsel %vm641, %v609, %v673
  %v706 = vsel %vm642, %v610, %v674
  %v707 = vsel %vm643, %v611, %v675
  %v708 = vsel %vm644, %v612, %v676
  %v709 = vsel %vm645, %v613, %v677
  %v710 = vsel %vm646, %v614, %v678
  %v711 = vsel %vm647, %v615, %v679
  %v712 = vsel %vm648, %v616, %v680
  %v713 = vsel %vm649, %v617, %v681
  %v714 = vsel %vm650, %v618, %v682
  %v715 = vsel %vm651, %v619, %v683
  %v716 = vsel %vm652, %v620, %v684
  %v717 = vsel %vm653, %v621, %v685
  %v718 = vsel %vm654, %v622, %v686
  %v719 = vsel %vm655, %v623, %v687
  %v720 = vsel %vm656, %v624, %v688
  %v721 = vsel %vm657, %v625, %v689
  %v722 = vsel %vm658, %v626, %v690
  %v723 = vsel %vm659, %v627, %v691
  %v724 = vsel %vm660, %v628, %v692
  %v725 = vsel %vm661, %v629, %v693
  %v726 = vsel %vm662, %v630, %v694
  %v727 = vsel %vm663, %v631, %v695
  %v728 = vsel %vm664, %v632, %v696
  %v729 = vsel %vm665, %v633, %v697
  %v730 = vsel %vm666, %v634, %v698
  %v731 = vsel %vm667, %v635, %v699
  %v732 = vsel %vm668, %v636, %v700
  %v733 = vsel %vm669, %v637, %v701
  %v734 = vld [vmem:[%s5] sm:$0x1]
  %v736 = vlaneseq
  %v737 = vshrl.u32 %v736, 7
  %v738 = vsub.s32 0, %v737
  %v739 = vrot.slane %v734, %v738
  %v741 = vmul.f32 %v702, %v739
  %v742 = vmul.f32 %v703, %v739
  %v743 = vmul.f32 %v704, %v739
  %v744 = vmul.f32 %v705, %v739
  %v745 = vmul.f32 %v706, %v739
  %v746 = vmul.f32 %v707, %v739
  %v747 = vmul.f32 %v708, %v739
  %v748 = vmul.f32 %v709, %v739
  %v749 = vmul.f32 %v710, %v739
  %v750 = vmul.f32 %v711, %v739
  %v751 = vmul.f32 %v712, %v739
  %v752 = vmul.f32 %v713, %v739
  %v753 = vmul.f32 %v714, %v739
  %v754 = vmul.f32 %v715, %v739
  %v755 = vmul.f32 %v716, %v739
  %v756 = vmul.f32 %v717, %v739
  %v757 = vmul.f32 %v718, %v739
  %v758 = vmul.f32 %v719, %v739
  %v759 = vmul.f32 %v720, %v739
  %v760 = vmul.f32 %v721, %v739
  %v761 = vmul.f32 %v722, %v739
  %v762 = vmul.f32 %v723, %v739
  %v763 = vmul.f32 %v724, %v739
  %v764 = vmul.f32 %v725, %v739
  %v765 = vmul.f32 %v726, %v739
  %v766 = vmul.f32 %v727, %v739
  %v767 = vmul.f32 %v728, %v739
  %v768 = vmul.f32 %v729, %v739
  %v769 = vmul.f32 %v730, %v739
  %v770 = vmul.f32 %v731, %v739
  %v771 = vmul.f32 %v732, %v739
  %v772 = vmul.f32 %v733, %v739
  %vm773 = vcmask 130048
  %v774 = vsel %vm773, %v741, 0.0
  %775 = vadd.xlane.f32.xlu0 %v774
  %v776 = vpop.xlane.xlu0 %775
  %v777 = vsel %vm773, %v742, 0.0
  %778 = vadd.xlane.f32.xlu0 %v777
  %v779 = vpop.xlane.xlu0 %778
  %v780 = vsel %vm773, %v743, 0.0
  %781 = vadd.xlane.f32.xlu0 %v780
  %v782 = vpop.xlane.xlu0 %781
  %v783 = vsel %vm773, %v744, 0.0
  %784 = vadd.xlane.f32.xlu0 %v783
  %v785 = vpop.xlane.xlu0 %784
  %v786 = vsel %vm773, %v745, 0.0
  %787 = vadd.xlane.f32.xlu0 %v786
  %v788 = vpop.xlane.xlu0 %787
  %v789 = vsel %vm773, %v746, 0.0
  %790 = vadd.xlane.f32.xlu0 %v789
  %v791 = vpop.xlane.xlu0 %790
  %v792 = vsel %vm773, %v747, 0.0
  %793 = vadd.xlane.f32.xlu0 %v792
  %v794 = vpop.xlane.xlu0 %793
  %v795 = vsel %vm773, %v748, 0.0
  %796 = vadd.xlane.f32.xlu0 %v795
  %v797 = vpop.xlane.xlu0 %796
  %v798 = vsel %vm773, %v749, 0.0
  %799 = vadd.xlane.f32.xlu0 %v798
  %v800 = vpop.xlane.xlu0 %799
  %v801 = vsel %vm773, %v750, 0.0
  %802 = vadd.xlane.f32.xlu0 %v801
  %v803 = vpop.xlane.xlu0 %802
  %v804 = vsel %vm773, %v751, 0.0
  %805 = vadd.xlane.f32.xlu0 %v804
  %v806 = vpop.xlane.xlu0 %805
  %v807 = vsel %vm773, %v752, 0.0
  %808 = vadd.xlane.f32.xlu0 %v807
  %v809 = vpop.xlane.xlu0 %808
  %v810 = vsel %vm773, %v753, 0.0
  %811 = vadd.xlane.f32.xlu0 %v810
  %v812 = vpop.xlane.xlu0 %811
  %v813 = vsel %vm773, %v754, 0.0
  %814 = vadd.xlane.f32.xlu0 %v813
  %v815 = vpop.xlane.xlu0 %814
  %v816 = vsel %vm773, %v755, 0.0
  %817 = vadd.xlane.f32.xlu0 %v816
  %v818 = vpop.xlane.xlu0 %817
  %v819 = vsel %vm773, %v756, 0.0
  %820 = vadd.xlane.f32.xlu0 %v819
  %v821 = vpop.xlane.xlu0 %820
  %v822 = vsel %vm773, %v757, 0.0
  %823 = vadd.xlane.f32.xlu0 %v822
  %v824 = vpop.xlane.xlu0 %823
  %v825 = vsel %vm773, %v758, 0.0
  %826 = vadd.xlane.f32.xlu0 %v825
  %v827 = vpop.xlane.xlu0 %826
  %v828 = vsel %vm773, %v759, 0.0
  %829 = vadd.xlane.f32.xlu0 %v828
  %v830 = vpop.xlane.xlu0 %829
  %v831 = vsel %vm773, %v760, 0.0
  %832 = vadd.xlane.f32.xlu0 %v831
  %v833 = vpop.xlane.xlu0 %832
  %v834 = vsel %vm773, %v761, 0.0
  %835 = vadd.xlane.f32.xlu0 %v834
  %v836 = vpop.xlane.xlu0 %835
  %v837 = vsel %vm773, %v762, 0.0
  %838 = vadd.xlane.f32.xlu0 %v837
  %v839 = vpop.xlane.xlu0 %838
  %v840 = vsel %vm773, %v763, 0.0
  %841 = vadd.xlane.f32.xlu0 %v840
  %v842 = vpop.xlane.xlu0 %841
  %v843 = vsel %vm773, %v764, 0.0
  %844 = vadd.xlane.f32.xlu0 %v843
  %v845 = vpop.xlane.xlu0 %844
  %v846 = vsel %vm773, %v765, 0.0
  %847 = vadd.xlane.f32.xlu0 %v846
  %v848 = vpop.xlane.xlu0 %847
  %v849 = vsel %vm773, %v766, 0.0
  %850 = vadd.xlane.f32.xlu0 %v849
  %v851 = vpop.xlane.xlu0 %850
  %v852 = vsel %vm773, %v767, 0.0
  %853 = vadd.xlane.f32.xlu0 %v852
  %v854 = vpop.xlane.xlu0 %853
  %v855 = vsel %vm773, %v768, 0.0
  %856 = vadd.xlane.f32.xlu0 %v855
  %v857 = vpop.xlane.xlu0 %856
  %v858 = vsel %vm773, %v769, 0.0
  %859 = vadd.xlane.f32.xlu0 %v858
  %v860 = vpop.xlane.xlu0 %859
  %v861 = vsel %vm773, %v770, 0.0
  %862 = vadd.xlane.f32.xlu0 %v861
  %v863 = vpop.xlane.xlu0 %862
  %v864 = vsel %vm773, %v771, 0.0
  %865 = vadd.xlane.f32.xlu0 %v864
  %v866 = vpop.xlane.xlu0 %865
  %v867 = vsel %vm773, %v772, 0.0
  %868 = vadd.xlane.f32.xlu0 %v867
  %v869 = vpop.xlane.xlu0 %868
  %v902 = vlaneseq
  %v903 = vand.u32 %v902, 127
  %v904 = vlaneseq
  %v905 = vshrl.u32 %v904, 7
  %v906 = vsub.s32 %v903, %v905
  %v907 = vrot.slane %v776, %v906
  %v908 = vadd.s32 %v903, 4294967288
  %v909 = vlaneseq
  %v910 = vshrl.u32 %v909, 7
  %v911 = vsub.s32 %v908, %v910
  %v912 = vrot.slane %v779, %v911
  %vm913 = vcmask 130112
  %v914 = vsel %vm913, %v912, %v907
  %v915 = vlaneseq
  %v916 = vshrl.u32 %v915, 7
  %v917 = vsub.s32 %v903, %v916
  %v918 = vrot.slane %v782, %v917
  %v919 = vlaneseq
  %v920 = vshrl.u32 %v919, 7
  %v921 = vsub.s32 %v908, %v920
  %v922 = vrot.slane %v785, %v921
  %v923 = vsel %vm913, %v922, %v918
  %v924 = vlaneseq
  %v925 = vshrl.u32 %v924, 7
  %v926 = vsub.s32 %v903, %v925
  %v927 = vrot.slane %v788, %v926
  %v928 = vlaneseq
  %v929 = vshrl.u32 %v928, 7
  %v930 = vsub.s32 %v908, %v929
  %v931 = vrot.slane %v791, %v930
  %v932 = vsel %vm913, %v931, %v927
  %v933 = vlaneseq
  %v934 = vshrl.u32 %v933, 7
  %v935 = vsub.s32 %v903, %v934
  %v936 = vrot.slane %v794, %v935
  %v937 = vlaneseq
  %v938 = vshrl.u32 %v937, 7
  %v939 = vsub.s32 %v908, %v938
  %v940 = vrot.slane %v797, %v939
  %v941 = vsel %vm913, %v940, %v936
  %v942 = vlaneseq
  %v943 = vshrl.u32 %v942, 7
  %v944 = vsub.s32 %v903, %v943
  %v945 = vrot.slane %v800, %v944
  %v946 = vlaneseq
  %v947 = vshrl.u32 %v946, 7
  %v948 = vsub.s32 %v908, %v947
  %v949 = vrot.slane %v803, %v948
  %v950 = vsel %vm913, %v949, %v945
  %v951 = vlaneseq
  %v952 = vshrl.u32 %v951, 7
  %v953 = vsub.s32 %v903, %v952
  %v954 = vrot.slane %v806, %v953
  %v955 = vlaneseq
  %v956 = vshrl.u32 %v955, 7
  %v957 = vsub.s32 %v908, %v956
  %v958 = vrot.slane %v809, %v957
  %v959 = vsel %vm913, %v958, %v954
  %v960 = vlaneseq
  %v961 = vshrl.u32 %v960, 7
  %v962 = vsub.s32 %v903, %v961
  %v963 = vrot.slane %v812, %v962
  %v964 = vlaneseq
  %v965 = vshrl.u32 %v964, 7
  %v966 = vsub.s32 %v908, %v965
  %v967 = vrot.slane %v815, %v966
  %v968 = vsel %vm913, %v967, %v963
  %v969 = vlaneseq
  %v970 = vshrl.u32 %v969, 7
  %v971 = vsub.s32 %v903, %v970
  %v972 = vrot.slane %v818, %v971
  %v973 = vlaneseq
  %v974 = vshrl.u32 %v973, 7
  %v975 = vsub.s32 %v908, %v974
  %v976 = vrot.slane %v821, %v975
  %v977 = vsel %vm913, %v976, %v972
  %v978 = vlaneseq
  %v979 = vshrl.u32 %v978, 7
  %v980 = vsub.s32 %v903, %v979
  %v981 = vrot.slane %v824, %v980
  %v982 = vlaneseq
  %v983 = vshrl.u32 %v982, 7
  %v984 = vsub.s32 %v908, %v983
  %v985 = vrot.slane %v827, %v984
  %v986 = vsel %vm913, %v985, %v981
  %v987 = vlaneseq
  %v988 = vshrl.u32 %v987, 7
  %v989 = vsub.s32 %v903, %v988
  %v990 = vrot.slane %v830, %v989
  %v991 = vlaneseq
  %v992 = vshrl.u32 %v991, 7
  %v993 = vsub.s32 %v908, %v992
  %v994 = vrot.slane %v833, %v993
  %v995 = vsel %vm913, %v994, %v990
  %v996 = vlaneseq
  %v997 = vshrl.u32 %v996, 7
  %v998 = vsub.s32 %v903, %v997
  %v999 = vrot.slane %v836, %v998
  %v1000 = vlaneseq
  %v1001 = vshrl.u32 %v1000, 7
  %v1002 = vsub.s32 %v908, %v1001
  %v1003 = vrot.slane %v839, %v1002
  %v1004 = vsel %vm913, %v1003, %v999
  %v1005 = vlaneseq
  %v1006 = vshrl.u32 %v1005, 7
  %v1007 = vsub.s32 %v903, %v1006
  %v1008 = vrot.slane %v842, %v1007
  %v1009 = vlaneseq
  %v1010 = vshrl.u32 %v1009, 7
  %v1011 = vsub.s32 %v908, %v1010
  %v1012 = vrot.slane %v845, %v1011
  %v1013 = vsel %vm913, %v1012, %v1008
  %v1014 = vlaneseq
  %v1015 = vshrl.u32 %v1014, 7
  %v1016 = vsub.s32 %v903, %v1015
  %v1017 = vrot.slane %v848, %v1016
  %v1018 = vlaneseq
  %v1019 = vshrl.u32 %v1018, 7
  %v1020 = vsub.s32 %v908, %v1019
  %v1021 = vrot.slane %v851, %v1020
  %v1022 = vsel %vm913, %v1021, %v1017
  %v1023 = vlaneseq
  %v1024 = vshrl.u32 %v1023, 7
  %v1025 = vsub.s32 %v903, %v1024
  %v1026 = vrot.slane %v854, %v1025
  %v1027 = vlaneseq
  %v1028 = vshrl.u32 %v1027, 7
  %v1029 = vsub.s32 %v908, %v1028
  %v1030 = vrot.slane %v857, %v1029
  %v1031 = vsel %vm913, %v1030, %v1026
  %v1032 = vlaneseq
  %v1033 = vshrl.u32 %v1032, 7
  %v1034 = vsub.s32 %v903, %v1033
  %v1035 = vrot.slane %v860, %v1034
  %v1036 = vlaneseq
  %v1037 = vshrl.u32 %v1036, 7
  %v1038 = vsub.s32 %v908, %v1037
  %v1039 = vrot.slane %v863, %v1038
  %v1040 = vsel %vm913, %v1039, %v1035
  %v1041 = vlaneseq
  %v1042 = vshrl.u32 %v1041, 7
  %v1043 = vsub.s32 %v903, %v1042
  %v1044 = vrot.slane %v866, %v1043
  %v1045 = vlaneseq
  %v1046 = vshrl.u32 %v1045, 7
  %v1047 = vsub.s32 %v908, %v1046
  %v1048 = vrot.slane %v869, %v1047
  %v1049 = vsel %vm913, %v1048, %v1044
  %vm1050 = vcmask 1041409
  %v1051 = vsel %vm1050, %v923, %v914
  %vm1052 = vcmask 1042434
  %v1053 = vsel %vm1052, %v932, %v1051
  %vm1054 = vcmask 1043459
  %v1055 = vsel %vm1054, %v941, %v1053
  %vm1056 = vcmask 1044484
  %v1057 = vsel %vm1056, %v950, %v1055
  %vm1058 = vcmask 1045509
  %v1059 = vsel %vm1058, %v959, %v1057
  %vm1060 = vcmask 1046534
  %v1061 = vsel %vm1060, %v968, %v1059
  %vm1062 = vcmask 1047559
  %v1063 = vsel %vm1062, %v977, %v1061
  %v1064 = vsel %vm1050, %v995, %v986
  %v1065 = vsel %vm1052, %v1004, %v1064
  %v1066 = vsel %vm1054, %v1013, %v1065
  %v1067 = vsel %vm1056, %v1022, %v1066
  %v1068 = vsel %vm1058, %v1031, %v1067
  %v1069 = vsel %vm1060, %v1040, %v1068
  %v1070 = vsel %vm1062, %v1049, %v1069
  %v1073 = vsel %vm28, %v1063, -1e+30
  %v1074 = vsel %vm29, %v1070, -1e+30
  %v1075 = vsel %vm773, %v1073, -inf
  %1076 = vmax.xlane.f32.xlu0 %v1075
  %v1077 = vpop.xlane.xlu0 %1076
  %v1078 = vsel %vm773, %v1074, -inf
  %1079 = vmax.xlane.f32.xlu0 %v1078
  %v1080 = vpop.xlane.xlu0 %1079
  %v1081 = vsub.f32 %v1073, %v1077
  %v1082 = vsub.f32 %v1074, %v1080
  %v1083 = vmul.f32 %v1081, 1.442695
  %v1084 = vpow.pop %v1083
  %v1085 = vmul.f32 %v1082, 1.442695
  %v1086 = vpow.pop %v1085
  %v1087 = vsel %vm28, %v1084, 0.0
  %v1088 = vsel %vm29, %v1086, 0.0
  %v1089 = vsel %vm773, %v1087, 0.0
  %1090 = vadd.xlane.f32.xlu0 %v1089
  %v1091 = vpop.xlane.xlu0 %1090
  %v1092 = vsel %vm773, %v1088, 0.0
  %1093 = vadd.xlane.f32.xlu0 %v1092
  %v1094 = vpop.xlane.xlu0 %1093
  %v1095 = vmax.f32 %v1091, 1e-30
  %v1096 = vmax.f32 %v1094, 1e-30
  %v1097 = vrcp.pop %v1095
  %v1098 = vrcp.pop %v1096
  %v1099 = vmul.f32 %v1087, %v1097
  %v1100 = vmul.f32 %v1088, %v1098
  %s1101 = scalar_lea.vmem %s0, 16
  %v1102 = vld [vmem:[%s1101] sm:$0xff]
  %v1103 = vld [vmem:[%s1101 + $0x8] sm:$0xff]
  %s1104 = scalar_lea.vmem %s1, 16
  %v1105 = vld [vmem:[%s1104] sm:$0xff]
  %v1106 = vld [vmem:[%s1104 + $0x8] sm:$0xff]
  %s1107 = scalar_lea.vmem %s4, 16
  %v1108 = vld [vmem:[%s1107] sm:$0xff]
  %v1109 = vld [vmem:[%s1107 + $0x8] sm:$0x1]
  %v1111 = vsel %vm165, %v1109, 0
  %1113 = vmatprep.subr.mxu0 0.0
  %1114 = vmatpush1.msra.mxu0 0.0
  %1115 = vmatprep.subr.mxu0 0.0
  %1116 = vmatpush1.msra.mxu0 0.0
  %1117 = vmatprep.subr.mxu0 0.0
  %1118 = vmatpush1.msra.mxu0 0.0
  %1119 = vmatprep.subr.mxu0 0.0
  %1120 = vmatpush1.msra.mxu0 0.0
  %1121 = vmatprep.subr.mxu0 0.0
  %1122 = vmatpush1.msra.mxu0 0.0
  %1123 = vmatprep.subr.mxu0 0.0
  %1124 = vmatpush1.msra.mxu0 0.0
  %1125 = vmatprep.subr.mxu0 0.0
  %1126 = vmatpush1.msra.mxu0 0.0
  %1127 = vmatprep.subr.mxu0 0.0
  %1128 = vmatpush1.msra.mxu0 0.0
  %1129 = vmatprep.subr.mxu0 0.0
  %1130 = vmatpush1.msra.mxu0 0.0
  %1131 = vmatprep.subr.mxu0 0.0
  %1132 = vmatpush1.msra.mxu0 0.0
  %1133 = vmatprep.subr.mxu0 0.0
  %1134 = vmatpush1.msra.mxu0 0.0
  %1135 = vmatprep.subr.mxu0 0.0
  %1136 = vmatpush1.msra.mxu0 0.0
  %1137 = vmatprep.subr.mxu0 0.0
  %1138 = vmatpush1.msra.mxu0 0.0
  %1139 = vmatprep.subr.mxu0 0.0
  %1140 = vmatpush1.msra.mxu0 0.0
  %1141 = vmatprep.subr.mxu0 0.0
  %1142 = vmatpush1.msra.mxu0 %v1111
  %1143 = vmatprep.subr.mxu0 0.0
  %1144 = vmatpush1.msra.mxu0 %v1108
  %1145 = vmatprep.subr.mxu0 0.0
  %1146 = vmatpush2.msra.mxu0 0.0
  %1147 = vmatprep.subr.mxu0 0.0
  %1148 = vmatpush2.msra.mxu0 0.0
  %1149 = vmatprep.subr.mxu0 0.0
  %1150 = vmatpush2.msra.mxu0 0.0
  %1151 = vmatprep.subr.mxu0 0.0
  %1152 = vmatpush2.msra.mxu0 0.0
  %1153 = vmatprep.subr.mxu0 0.0
  %1154 = vmatpush2.msra.mxu0 0.0
  %1155 = vmatprep.subr.mxu0 0.0
  %1156 = vmatpush2.msra.mxu0 0.0
  %1157 = vmatprep.subr.mxu0 0.0
  %1158 = vmatpush2.msra.mxu0 0.0
  %1159 = vmatprep.subr.mxu0 0.0
  %1160 = vmatpush2.msra.mxu0 0.0
  %1161 = vmatprep.subr.mxu0 0.0
  %1162 = vmatpush2.msra.mxu0 0.0
  %1163 = vmatprep.subr.mxu0 0.0
  %1164 = vmatpush2.msra.mxu0 0.0
  %1165 = vmatprep.subr.mxu0 0.0
  %1166 = vmatpush2.msra.mxu0 0.0
  %1167 = vmatprep.subr.mxu0 0.0
  %1168 = vmatpush2.msra.mxu0 0.0
  %1169 = vmatprep.subr.mxu0 0.0
  %1170 = vmatpush2.msra.mxu0 0.0
  %1171 = vmatprep.subr.mxu0 0.0
  %1172 = vmatpush2.msra.mxu0 0.0
  %1173 = vmatprep.subr.mxu0 0.0
  %1174 = vmatpush2.msra.mxu0 0.0
  %1175 = vmatprep.subr.mxu0 0.0
  %1176 = vmatpush2.msra.mxu0 0.0
  %1177 = vmatprep.mubr.f32.mxu0 0.0
  %1178 = vmatmul.mubr.f32.gmra.mxu0 %v70
  %v1179 = vpop.f32.mrf.mxu0
  %v1180 = vadd.f32 0.0, %v1179
  %v1181 = vpop.f32.mrf.mxu0
  %1182 = vmatprep.mubr.f32.mxu0 0.0
  %1183 = vmatmul.mubr.f32.gmra.mxu0 %v73
  %v1184 = vpop.f32.mrf.mxu0
  %v1185 = vadd.f32 0.0, %v1184
  %v1186 = vpop.f32.mrf.mxu0
  %1187 = vmatprep.mubr.f32.mxu0 0.0
  %1188 = vmatmul.mubr.f32.gmra.mxu0 %v76
  %v1189 = vpop.f32.mrf.mxu0
  %v1190 = vadd.f32 0.0, %v1189
  %v1191 = vpop.f32.mrf.mxu0
  %1192 = vmatprep.mubr.f32.mxu0 0.0
  %1193 = vmatmul.mubr.f32.gmra.mxu0 %v79
  %v1194 = vpop.f32.mrf.mxu0
  %v1195 = vadd.f32 0.0, %v1194
  %v1196 = vpop.f32.mrf.mxu0
  %1197 = vmatprep.mubr.f32.mxu0 0.0
  %1198 = vmatmul.mubr.f32.gmra.mxu0 %v82
  %v1199 = vpop.f32.mrf.mxu0
  %v1200 = vadd.f32 0.0, %v1199
  %v1201 = vpop.f32.mrf.mxu0
  %1202 = vmatprep.mubr.f32.mxu0 0.0
  %1203 = vmatmul.mubr.f32.gmra.mxu0 %v85
  %v1204 = vpop.f32.mrf.mxu0
  %v1205 = vadd.f32 0.0, %v1204
  %v1206 = vpop.f32.mrf.mxu0
  %1207 = vmatprep.mubr.f32.mxu0 0.0
  %1208 = vmatmul.mubr.f32.gmra.mxu0 %v88
  %v1209 = vpop.f32.mrf.mxu0
  %v1210 = vadd.f32 0.0, %v1209
  %v1211 = vpop.f32.mrf.mxu0
  %1212 = vmatprep.mubr.f32.mxu0 0.0
  %1213 = vmatmul.mubr.f32.gmra.mxu0 %v91
  %v1214 = vpop.f32.mrf.mxu0
  %v1215 = vadd.f32 0.0, %v1214
  %v1216 = vpop.f32.mrf.mxu0
  %1217 = vmatprep.mubr.f32.mxu0 0.0
  %1218 = vmatmul.mubr.f32.gmra.mxu0 %v94
  %v1219 = vpop.f32.mrf.mxu0
  %v1220 = vadd.f32 0.0, %v1219
  %v1221 = vpop.f32.mrf.mxu0
  %1222 = vmatprep.mubr.f32.mxu0 0.0
  %1223 = vmatmul.mubr.f32.gmra.mxu0 %v97
  %v1224 = vpop.f32.mrf.mxu0
  %v1225 = vadd.f32 0.0, %v1224
  %v1226 = vpop.f32.mrf.mxu0
  %1227 = vmatprep.mubr.f32.mxu0 0.0
  %1228 = vmatmul.mubr.f32.gmra.mxu0 %v100
  %v1229 = vpop.f32.mrf.mxu0
  %v1230 = vadd.f32 0.0, %v1229
  %v1231 = vpop.f32.mrf.mxu0
  %1232 = vmatprep.mubr.f32.mxu0 0.0
  %1233 = vmatmul.mubr.f32.gmra.mxu0 %v103
  %v1234 = vpop.f32.mrf.mxu0
  %v1235 = vadd.f32 0.0, %v1234
  %v1236 = vpop.f32.mrf.mxu0
  %1237 = vmatprep.mubr.f32.mxu0 0.0
  %1238 = vmatmul.mubr.f32.gmra.mxu0 %v106
  %v1239 = vpop.f32.mrf.mxu0
  %v1240 = vadd.f32 0.0, %v1239
  %v1241 = vpop.f32.mrf.mxu0
  %1242 = vmatprep.mubr.f32.mxu0 0.0
  %1243 = vmatmul.mubr.f32.gmra.mxu0 %v109
  %v1244 = vpop.f32.mrf.mxu0
  %v1245 = vadd.f32 0.0, %v1244
  %v1246 = vpop.f32.mrf.mxu0
  %1247 = vmatprep.mubr.f32.mxu0 0.0
  %1248 = vmatmul.mubr.f32.gmra.mxu0 %v112
  %v1249 = vpop.f32.mrf.mxu0
  %v1250 = vadd.f32 0.0, %v1249
  %v1251 = vpop.f32.mrf.mxu0
  %1252 = vmatprep.mubr.f32.mxu0 0.0
  %1253 = vmatmul.mubr.f32.gmra.mxu0 %v115
  %v1254 = vpop.f32.mrf.mxu0
  %v1255 = vadd.f32 0.0, %v1254
  %v1256 = vpop.f32.mrf.mxu0
  %1257 = vmatprep.mubr.f32.mxu0 0.0
  %1258 = vmatmul.mubr.f32.gmra.mxu0 %v118
  %v1259 = vpop.f32.mrf.mxu0
  %v1260 = vadd.f32 0.0, %v1259
  %v1261 = vpop.f32.mrf.mxu0
  %1262 = vmatprep.mubr.f32.mxu0 0.0
  %1263 = vmatmul.mubr.f32.gmra.mxu0 %v121
  %v1264 = vpop.f32.mrf.mxu0
  %v1265 = vadd.f32 0.0, %v1264
  %v1266 = vpop.f32.mrf.mxu0
  %1267 = vmatprep.mubr.f32.mxu0 0.0
  %1268 = vmatmul.mubr.f32.gmra.mxu0 %v124
  %v1269 = vpop.f32.mrf.mxu0
  %v1270 = vadd.f32 0.0, %v1269
  %v1271 = vpop.f32.mrf.mxu0
  %1272 = vmatprep.mubr.f32.mxu0 0.0
  %1273 = vmatmul.mubr.f32.gmra.mxu0 %v127
  %v1274 = vpop.f32.mrf.mxu0
  %v1275 = vadd.f32 0.0, %v1274
  %v1276 = vpop.f32.mrf.mxu0
  %1277 = vmatprep.mubr.f32.mxu0 0.0
  %1278 = vmatmul.mubr.f32.gmra.mxu0 %v130
  %v1279 = vpop.f32.mrf.mxu0
  %v1280 = vadd.f32 0.0, %v1279
  %v1281 = vpop.f32.mrf.mxu0
  %1282 = vmatprep.mubr.f32.mxu0 0.0
  %1283 = vmatmul.mubr.f32.gmra.mxu0 %v133
  %v1284 = vpop.f32.mrf.mxu0
  %v1285 = vadd.f32 0.0, %v1284
  %v1286 = vpop.f32.mrf.mxu0
  %1287 = vmatprep.mubr.f32.mxu0 0.0
  %1288 = vmatmul.mubr.f32.gmra.mxu0 %v136
  %v1289 = vpop.f32.mrf.mxu0
  %v1290 = vadd.f32 0.0, %v1289
  %v1291 = vpop.f32.mrf.mxu0
  %1292 = vmatprep.mubr.f32.mxu0 0.0
  %1293 = vmatmul.mubr.f32.gmra.mxu0 %v139
  %v1294 = vpop.f32.mrf.mxu0
  %v1295 = vadd.f32 0.0, %v1294
  %v1296 = vpop.f32.mrf.mxu0
  %1297 = vmatprep.mubr.f32.mxu0 0.0
  %1298 = vmatmul.mubr.f32.gmra.mxu0 %v142
  %v1299 = vpop.f32.mrf.mxu0
  %v1300 = vadd.f32 0.0, %v1299
  %v1301 = vpop.f32.mrf.mxu0
  %1302 = vmatprep.mubr.f32.mxu0 0.0
  %1303 = vmatmul.mubr.f32.gmra.mxu0 %v145
  %v1304 = vpop.f32.mrf.mxu0
  %v1305 = vadd.f32 0.0, %v1304
  %v1306 = vpop.f32.mrf.mxu0
  %1307 = vmatprep.mubr.f32.mxu0 0.0
  %1308 = vmatmul.mubr.f32.gmra.mxu0 %v148
  %v1309 = vpop.f32.mrf.mxu0
  %v1310 = vadd.f32 0.0, %v1309
  %v1311 = vpop.f32.mrf.mxu0
  %1312 = vmatprep.mubr.f32.mxu0 0.0
  %1313 = vmatmul.mubr.f32.gmra.mxu0 %v151
  %v1314 = vpop.f32.mrf.mxu0
  %v1315 = vadd.f32 0.0, %v1314
  %v1316 = vpop.f32.mrf.mxu0
  %1317 = vmatprep.mubr.f32.mxu0 0.0
  %1318 = vmatmul.mubr.f32.gmra.mxu0 %v154
  %v1319 = vpop.f32.mrf.mxu0
  %v1320 = vadd.f32 0.0, %v1319
  %v1321 = vpop.f32.mrf.mxu0
  %1322 = vmatprep.mubr.f32.mxu0 0.0
  %1323 = vmatmul.mubr.f32.gmra.mxu0 %v157
  %v1324 = vpop.f32.mrf.mxu0
  %v1325 = vadd.f32 0.0, %v1324
  %v1326 = vpop.f32.mrf.mxu0
  %1327 = vmatprep.mubr.f32.mxu0 0.0
  %1328 = vmatmul.mubr.f32.gmra.mxu0 %v160
  %v1329 = vpop.f32.mrf.mxu0
  %v1330 = vadd.f32 0.0, %v1329
  %v1331 = vpop.f32.mrf.mxu0
  %1332 = vmatprep.mubr.f32.mxu0 0.0
  %1333 = vmatmul.mubr.f32.gmra.mxu0 %v163
  %v1334 = vpop.f32.mrf.mxu0
  %v1335 = vadd.f32 0.0, %v1334
  %v1336 = vpop.f32.mrf.mxu0
  %1337 = vdwg.mxu0
  %v1338 = vadd.f32 %v1180, %v1102
  %v1339 = vadd.f32 %v1185, %v1103
  %v1340 = vadd.f32 %v1190, %v1102
  %v1341 = vadd.f32 %v1195, %v1103
  %v1342 = vadd.f32 %v1200, %v1102
  %v1343 = vadd.f32 %v1205, %v1103
  %v1344 = vadd.f32 %v1210, %v1102
  %v1345 = vadd.f32 %v1215, %v1103
  %v1346 = vadd.f32 %v1220, %v1102
  %v1347 = vadd.f32 %v1225, %v1103
  %v1348 = vadd.f32 %v1230, %v1102
  %v1349 = vadd.f32 %v1235, %v1103
  %v1350 = vadd.f32 %v1240, %v1102
  %v1351 = vadd.f32 %v1245, %v1103
  %v1352 = vadd.f32 %v1250, %v1102
  %v1353 = vadd.f32 %v1255, %v1103
  %v1354 = vadd.f32 %v1260, %v1102
  %v1355 = vadd.f32 %v1265, %v1103
  %v1356 = vadd.f32 %v1270, %v1102
  %v1357 = vadd.f32 %v1275, %v1103
  %v1358 = vadd.f32 %v1280, %v1102
  %v1359 = vadd.f32 %v1285, %v1103
  %v1360 = vadd.f32 %v1290, %v1102
  %v1361 = vadd.f32 %v1295, %v1103
  %v1362 = vadd.f32 %v1300, %v1102
  %v1363 = vadd.f32 %v1305, %v1103
  %v1364 = vadd.f32 %v1310, %v1102
  %v1365 = vadd.f32 %v1315, %v1103
  %v1366 = vadd.f32 %v1320, %v1102
  %v1367 = vadd.f32 %v1325, %v1103
  %v1368 = vadd.f32 %v1330, %v1102
  %v1369 = vadd.f32 %v1335, %v1103
  %v1372 = vcombine.high %v1105, %v1105
  %v1374 = vunpack.c.l.s4 1966171168
  %v1375 = vunpack.c.0.s8 %v1374
  %v1376 = vlaneseq
  %v1377 = vshrl.u32 %v1376, 7
  %v1378 = vsub.s32 %v1375, %v1377
  %v1379 = vrot.slane %v1105, %v1378
  %v1381 = vunpack.c.l.s4 1966171168
  %v1382 = vunpack.c.0.s8 %v1381
  %v1383 = vlaneseq
  %v1384 = vshrl.u32 %v1383, 7
  %v1385 = vsub.s32 %v1382, %v1384
  %v1386 = vrot.slane %v1372, %v1385
  %v1387 = vcombine.high %v1379, %v1379
  %v1388 = vcombine.high %v1386, %v1386
  %v1390 = vunpack.c.l.s4 1966171168
  %v1391 = vunpack.c.0.s8 %v1390
  %v1392 = vlaneseq
  %v1393 = vshrl.u32 %v1392, 7
  %v1394 = vsub.s32 %v1391, %v1393
  %v1395 = vrot.slane %v1379, %v1394
  %v1397 = vunpack.c.l.s4 1966171168
  %v1398 = vunpack.c.0.s8 %v1397
  %v1399 = vlaneseq
  %v1400 = vshrl.u32 %v1399, 7
  %v1401 = vsub.s32 %v1398, %v1400
  %v1402 = vrot.slane %v1386, %v1401
  %v1404 = vunpack.c.l.s4 1966171168
  %v1405 = vunpack.c.0.s8 %v1404
  %v1406 = vlaneseq
  %v1407 = vshrl.u32 %v1406, 7
  %v1408 = vsub.s32 %v1405, %v1407
  %v1409 = vrot.slane %v1387, %v1408
  %v1411 = vunpack.c.l.s4 1966171168
  %v1412 = vunpack.c.0.s8 %v1411
  %v1413 = vlaneseq
  %v1414 = vshrl.u32 %v1413, 7
  %v1415 = vsub.s32 %v1412, %v1414
  %v1416 = vrot.slane %v1388, %v1415
  %v1417 = vcombine.high %v1395, %v1395
  %v1418 = vcombine.high %v1402, %v1402
  %v1419 = vcombine.high %v1409, %v1409
  %v1420 = vcombine.high %v1416, %v1416
  %v1421 = vcombine.high %v1106, %v1106
  %v1423 = vunpack.c.l.s4 1966171168
  %v1424 = vunpack.c.0.s8 %v1423
  %v1425 = vlaneseq
  %v1426 = vshrl.u32 %v1425, 7
  %v1427 = vsub.s32 %v1424, %v1426
  %v1428 = vrot.slane %v1106, %v1427
  %v1430 = vunpack.c.l.s4 1966171168
  %v1431 = vunpack.c.0.s8 %v1430
  %v1432 = vlaneseq
  %v1433 = vshrl.u32 %v1432, 7
  %v1434 = vsub.s32 %v1431, %v1433
  %v1435 = vrot.slane %v1421, %v1434
  %v1436 = vcombine.high %v1428, %v1428
  %v1437 = vcombine.high %v1435, %v1435
  %v1439 = vunpack.c.l.s4 1966171168
  %v1440 = vunpack.c.0.s8 %v1439
  %v1441 = vlaneseq
  %v1442 = vshrl.u32 %v1441, 7
  %v1443 = vsub.s32 %v1440, %v1442
  %v1444 = vrot.slane %v1428, %v1443
  %v1446 = vunpack.c.l.s4 1966171168
  %v1447 = vunpack.c.0.s8 %v1446
  %v1448 = vlaneseq
  %v1449 = vshrl.u32 %v1448, 7
  %v1450 = vsub.s32 %v1447, %v1449
  %v1451 = vrot.slane %v1435, %v1450
  %v1453 = vunpack.c.l.s4 1966171168
  %v1454 = vunpack.c.0.s8 %v1453
  %v1455 = vlaneseq
  %v1456 = vshrl.u32 %v1455, 7
  %v1457 = vsub.s32 %v1454, %v1456
  %v1458 = vrot.slane %v1436, %v1457
  %v1460 = vunpack.c.l.s4 1966171168
  %v1461 = vunpack.c.0.s8 %v1460
  %v1462 = vlaneseq
  %v1463 = vshrl.u32 %v1462, 7
  %v1464 = vsub.s32 %v1461, %v1463
  %v1465 = vrot.slane %v1437, %v1464
  %v1466 = vcombine.high %v1444, %v1444
  %v1467 = vcombine.high %v1451, %v1451
  %v1468 = vcombine.high %v1458, %v1458
  %v1469 = vcombine.high %v1465, %v1465
  %v1470 = vlaneseq
  %v1471 = vshrl.u32 %v1470, 7
  %v1472 = vsub.s32 0, %v1471
  %v1473 = vrot.slane %v1395, %v1472
  %v1474 = vlaneseq
  %v1475 = vshrl.u32 %v1474, 7
  %v1476 = vsub.s32 0, %v1475
  %v1477 = vrot.slane %v1409, %v1476
  %v1478 = vlaneseq
  %v1479 = vshrl.u32 %v1478, 7
  %v1480 = vsub.s32 0, %v1479
  %v1481 = vrot.slane %v1417, %v1480
  %v1482 = vlaneseq
  %v1483 = vshrl.u32 %v1482, 7
  %v1484 = vsub.s32 0, %v1483
  %v1485 = vrot.slane %v1419, %v1484
  %v1486 = vlaneseq
  %v1487 = vshrl.u32 %v1486, 7
  %v1488 = vsub.s32 0, %v1487
  %v1489 = vrot.slane %v1402, %v1488
  %v1490 = vlaneseq
  %v1491 = vshrl.u32 %v1490, 7
  %v1492 = vsub.s32 0, %v1491
  %v1493 = vrot.slane %v1416, %v1492
  %v1494 = vlaneseq
  %v1495 = vshrl.u32 %v1494, 7
  %v1496 = vsub.s32 0, %v1495
  %v1497 = vrot.slane %v1418, %v1496
  %v1498 = vlaneseq
  %v1499 = vshrl.u32 %v1498, 7
  %v1500 = vsub.s32 0, %v1499
  %v1501 = vrot.slane %v1420, %v1500
  %v1502 = vlaneseq
  %v1503 = vshrl.u32 %v1502, 7
  %v1504 = vsub.s32 0, %v1503
  %v1505 = vrot.slane %v1444, %v1504
  %v1506 = vlaneseq
  %v1507 = vshrl.u32 %v1506, 7
  %v1508 = vsub.s32 0, %v1507
  %v1509 = vrot.slane %v1458, %v1508
  %v1510 = vlaneseq
  %v1511 = vshrl.u32 %v1510, 7
  %v1512 = vsub.s32 0, %v1511
  %v1513 = vrot.slane %v1466, %v1512
  %v1514 = vlaneseq
  %v1515 = vshrl.u32 %v1514, 7
  %v1516 = vsub.s32 0, %v1515
  %v1517 = vrot.slane %v1468, %v1516
  %v1518 = vlaneseq
  %v1519 = vshrl.u32 %v1518, 7
  %v1520 = vsub.s32 0, %v1519
  %v1521 = vrot.slane %v1451, %v1520
  %v1522 = vlaneseq
  %v1523 = vshrl.u32 %v1522, 7
  %v1524 = vsub.s32 0, %v1523
  %v1525 = vrot.slane %v1465, %v1524
  %v1526 = vlaneseq
  %v1527 = vshrl.u32 %v1526, 7
  %v1528 = vsub.s32 0, %v1527
  %v1529 = vrot.slane %v1467, %v1528
  %v1530 = vlaneseq
  %v1531 = vshrl.u32 %v1530, 7
  %v1532 = vsub.s32 0, %v1531
  %v1533 = vrot.slane %v1469, %v1532
  %v1550 = vadd.f32 %v1338, %v1473
  %v1551 = vadd.f32 %v1339, %v1473
  %v1552 = vadd.f32 %v1340, %v1477
  %v1553 = vadd.f32 %v1341, %v1477
  %v1554 = vadd.f32 %v1342, %v1481
  %v1555 = vadd.f32 %v1343, %v1481
  %v1556 = vadd.f32 %v1344, %v1485
  %v1557 = vadd.f32 %v1345, %v1485
  %v1558 = vadd.f32 %v1346, %v1489
  %v1559 = vadd.f32 %v1347, %v1489
  %v1560 = vadd.f32 %v1348, %v1493
  %v1561 = vadd.f32 %v1349, %v1493
  %v1562 = vadd.f32 %v1350, %v1497
  %v1563 = vadd.f32 %v1351, %v1497
  %v1564 = vadd.f32 %v1352, %v1501
  %v1565 = vadd.f32 %v1353, %v1501
  %v1566 = vadd.f32 %v1354, %v1505
  %v1567 = vadd.f32 %v1355, %v1505
  %v1568 = vadd.f32 %v1356, %v1509
  %v1569 = vadd.f32 %v1357, %v1509
  %v1570 = vadd.f32 %v1358, %v1513
  %v1571 = vadd.f32 %v1359, %v1513
  %v1572 = vadd.f32 %v1360, %v1517
  %v1573 = vadd.f32 %v1361, %v1517
  %v1574 = vadd.f32 %v1362, %v1521
  %v1575 = vadd.f32 %v1363, %v1521
  %v1576 = vadd.f32 %v1364, %v1525
  %v1577 = vadd.f32 %v1365, %v1525
  %v1578 = vadd.f32 %v1366, %v1529
  %v1579 = vadd.f32 %v1367, %v1529
  %v1580 = vadd.f32 %v1368, %v1533
  %v1581 = vadd.f32 %v1369, %v1533
  %vm1582 = vcmp.ge.f32.partialorder %v1550, 0.0
  %vm1583 = vcmp.ge.f32.partialorder %v1551, 0.0
  %vm1584 = vcmp.ge.f32.partialorder %v1552, 0.0
  %vm1585 = vcmp.ge.f32.partialorder %v1553, 0.0
  %vm1586 = vcmp.ge.f32.partialorder %v1554, 0.0
  %vm1587 = vcmp.ge.f32.partialorder %v1555, 0.0
  %vm1588 = vcmp.ge.f32.partialorder %v1556, 0.0
  %vm1589 = vcmp.ge.f32.partialorder %v1557, 0.0
  %vm1590 = vcmp.ge.f32.partialorder %v1558, 0.0
  %vm1591 = vcmp.ge.f32.partialorder %v1559, 0.0
  %vm1592 = vcmp.ge.f32.partialorder %v1560, 0.0
  %vm1593 = vcmp.ge.f32.partialorder %v1561, 0.0
  %vm1594 = vcmp.ge.f32.partialorder %v1562, 0.0
  %vm1595 = vcmp.ge.f32.partialorder %v1563, 0.0
  %vm1596 = vcmp.ge.f32.partialorder %v1564, 0.0
  %vm1597 = vcmp.ge.f32.partialorder %v1565, 0.0
  %vm1598 = vcmp.ge.f32.partialorder %v1566, 0.0
  %vm1599 = vcmp.ge.f32.partialorder %v1567, 0.0
  %vm1600 = vcmp.ge.f32.partialorder %v1568, 0.0
  %vm1601 = vcmp.ge.f32.partialorder %v1569, 0.0
  %vm1602 = vcmp.ge.f32.partialorder %v1570, 0.0
  %vm1603 = vcmp.ge.f32.partialorder %v1571, 0.0
  %vm1604 = vcmp.ge.f32.partialorder %v1572, 0.0
  %vm1605 = vcmp.ge.f32.partialorder %v1573, 0.0
  %vm1606 = vcmp.ge.f32.partialorder %v1574, 0.0
  %vm1607 = vcmp.ge.f32.partialorder %v1575, 0.0
  %vm1608 = vcmp.ge.f32.partialorder %v1576, 0.0
  %vm1609 = vcmp.ge.f32.partialorder %v1577, 0.0
  %vm1610 = vcmp.ge.f32.partialorder %v1578, 0.0
  %vm1611 = vcmp.ge.f32.partialorder %v1579, 0.0
  %vm1612 = vcmp.ge.f32.partialorder %v1580, 0.0
  %vm1613 = vcmp.ge.f32.partialorder %v1581, 0.0
  %v1614 = vmul.f32 %v1550, 0.2
  %v1615 = vmul.f32 %v1551, 0.2
  %v1616 = vmul.f32 %v1552, 0.2
  %v1617 = vmul.f32 %v1553, 0.2
  %v1618 = vmul.f32 %v1554, 0.2
  %v1619 = vmul.f32 %v1555, 0.2
  %v1620 = vmul.f32 %v1556, 0.2
  %v1621 = vmul.f32 %v1557, 0.2
  %v1622 = vmul.f32 %v1558, 0.2
  %v1623 = vmul.f32 %v1559, 0.2
  %v1624 = vmul.f32 %v1560, 0.2
  %v1625 = vmul.f32 %v1561, 0.2
  %v1626 = vmul.f32 %v1562, 0.2
  %v1627 = vmul.f32 %v1563, 0.2
  %v1628 = vmul.f32 %v1564, 0.2
  %v1629 = vmul.f32 %v1565, 0.2
  %v1630 = vmul.f32 %v1566, 0.2
  %v1631 = vmul.f32 %v1567, 0.2
  %v1632 = vmul.f32 %v1568, 0.2
  %v1633 = vmul.f32 %v1569, 0.2
  %v1634 = vmul.f32 %v1570, 0.2
  %v1635 = vmul.f32 %v1571, 0.2
  %v1636 = vmul.f32 %v1572, 0.2
  %v1637 = vmul.f32 %v1573, 0.2
  %v1638 = vmul.f32 %v1574, 0.2
  %v1639 = vmul.f32 %v1575, 0.2
  %v1640 = vmul.f32 %v1576, 0.2
  %v1641 = vmul.f32 %v1577, 0.2
  %v1642 = vmul.f32 %v1578, 0.2
  %v1643 = vmul.f32 %v1579, 0.2
  %v1644 = vmul.f32 %v1580, 0.2
  %v1645 = vmul.f32 %v1581, 0.2
  %v1646 = vsel %vm1582, %v1550, %v1614
  %v1647 = vsel %vm1583, %v1551, %v1615
  %v1648 = vsel %vm1584, %v1552, %v1616
  %v1649 = vsel %vm1585, %v1553, %v1617
  %v1650 = vsel %vm1586, %v1554, %v1618
  %v1651 = vsel %vm1587, %v1555, %v1619
  %v1652 = vsel %vm1588, %v1556, %v1620
  %v1653 = vsel %vm1589, %v1557, %v1621
  %v1654 = vsel %vm1590, %v1558, %v1622
  %v1655 = vsel %vm1591, %v1559, %v1623
  %v1656 = vsel %vm1592, %v1560, %v1624
  %v1657 = vsel %vm1593, %v1561, %v1625
  %v1658 = vsel %vm1594, %v1562, %v1626
  %v1659 = vsel %vm1595, %v1563, %v1627
  %v1660 = vsel %vm1596, %v1564, %v1628
  %v1661 = vsel %vm1597, %v1565, %v1629
  %v1662 = vsel %vm1598, %v1566, %v1630
  %v1663 = vsel %vm1599, %v1567, %v1631
  %v1664 = vsel %vm1600, %v1568, %v1632
  %v1665 = vsel %vm1601, %v1569, %v1633
  %v1666 = vsel %vm1602, %v1570, %v1634
  %v1667 = vsel %vm1603, %v1571, %v1635
  %v1668 = vsel %vm1604, %v1572, %v1636
  %v1669 = vsel %vm1605, %v1573, %v1637
  %v1670 = vsel %vm1606, %v1574, %v1638
  %v1671 = vsel %vm1607, %v1575, %v1639
  %v1672 = vsel %vm1608, %v1576, %v1640
  %v1673 = vsel %vm1609, %v1577, %v1641
  %v1674 = vsel %vm1610, %v1578, %v1642
  %v1675 = vsel %vm1611, %v1579, %v1643
  %v1676 = vsel %vm1612, %v1580, %v1644
  %v1677 = vsel %vm1613, %v1581, %v1645
  %s1678 = scalar_lea.vmem %s5, 1
  %v1679 = vld [vmem:[%s1678] sm:$0x1]
  %v1681 = vlaneseq
  %v1682 = vshrl.u32 %v1681, 7
  %v1683 = vsub.s32 0, %v1682
  %v1684 = vrot.slane %v1679, %v1683
  %v1686 = vmul.f32 %v1646, %v1684
  %v1687 = vmul.f32 %v1647, %v1684
  %v1688 = vmul.f32 %v1648, %v1684
  %v1689 = vmul.f32 %v1649, %v1684
  %v1690 = vmul.f32 %v1650, %v1684
  %v1691 = vmul.f32 %v1651, %v1684
  %v1692 = vmul.f32 %v1652, %v1684
  %v1693 = vmul.f32 %v1653, %v1684
  %v1694 = vmul.f32 %v1654, %v1684
  %v1695 = vmul.f32 %v1655, %v1684
  %v1696 = vmul.f32 %v1656, %v1684
  %v1697 = vmul.f32 %v1657, %v1684
  %v1698 = vmul.f32 %v1658, %v1684
  %v1699 = vmul.f32 %v1659, %v1684
  %v1700 = vmul.f32 %v1660, %v1684
  %v1701 = vmul.f32 %v1661, %v1684
  %v1702 = vmul.f32 %v1662, %v1684
  %v1703 = vmul.f32 %v1663, %v1684
  %v1704 = vmul.f32 %v1664, %v1684
  %v1705 = vmul.f32 %v1665, %v1684
  %v1706 = vmul.f32 %v1666, %v1684
  %v1707 = vmul.f32 %v1667, %v1684
  %v1708 = vmul.f32 %v1668, %v1684
  %v1709 = vmul.f32 %v1669, %v1684
  %v1710 = vmul.f32 %v1670, %v1684
  %v1711 = vmul.f32 %v1671, %v1684
  %v1712 = vmul.f32 %v1672, %v1684
  %v1713 = vmul.f32 %v1673, %v1684
  %v1714 = vmul.f32 %v1674, %v1684
  %v1715 = vmul.f32 %v1675, %v1684
  %v1716 = vmul.f32 %v1676, %v1684
  %v1717 = vmul.f32 %v1677, %v1684
  %v1718 = vsel %vm773, %v1686, 0.0
  %1719 = vadd.xlane.f32.xlu0 %v1718
  %v1720 = vpop.xlane.xlu0 %1719
  %v1721 = vsel %vm773, %v1687, 0.0
  %1722 = vadd.xlane.f32.xlu0 %v1721
  %v1723 = vpop.xlane.xlu0 %1722
  %v1724 = vsel %vm773, %v1688, 0.0
  %1725 = vadd.xlane.f32.xlu0 %v1724
  %v1726 = vpop.xlane.xlu0 %1725
  %v1727 = vsel %vm773, %v1689, 0.0
  %1728 = vadd.xlane.f32.xlu0 %v1727
  %v1729 = vpop.xlane.xlu0 %1728
  %v1730 = vsel %vm773, %v1690, 0.0
  %1731 = vadd.xlane.f32.xlu0 %v1730
  %v1732 = vpop.xlane.xlu0 %1731
  %v1733 = vsel %vm773, %v1691, 0.0
  %1734 = vadd.xlane.f32.xlu0 %v1733
  %v1735 = vpop.xlane.xlu0 %1734
  %v1736 = vsel %vm773, %v1692, 0.0
  %1737 = vadd.xlane.f32.xlu0 %v1736
  %v1738 = vpop.xlane.xlu0 %1737
  %v1739 = vsel %vm773, %v1693, 0.0
  %1740 = vadd.xlane.f32.xlu0 %v1739
  %v1741 = vpop.xlane.xlu0 %1740
  %v1742 = vsel %vm773, %v1694, 0.0
  %1743 = vadd.xlane.f32.xlu0 %v1742
  %v1744 = vpop.xlane.xlu0 %1743
  %v1745 = vsel %vm773, %v1695, 0.0
  %1746 = vadd.xlane.f32.xlu0 %v1745
  %v1747 = vpop.xlane.xlu0 %1746
  %v1748 = vsel %vm773, %v1696, 0.0
  %1749 = vadd.xlane.f32.xlu0 %v1748
  %v1750 = vpop.xlane.xlu0 %1749
  %v1751 = vsel %vm773, %v1697, 0.0
  %1752 = vadd.xlane.f32.xlu0 %v1751
  %v1753 = vpop.xlane.xlu0 %1752
  %v1754 = vsel %vm773, %v1698, 0.0
  %1755 = vadd.xlane.f32.xlu0 %v1754
  %v1756 = vpop.xlane.xlu0 %1755
  %v1757 = vsel %vm773, %v1699, 0.0
  %1758 = vadd.xlane.f32.xlu0 %v1757
  %v1759 = vpop.xlane.xlu0 %1758
  %v1760 = vsel %vm773, %v1700, 0.0
  %1761 = vadd.xlane.f32.xlu0 %v1760
  %v1762 = vpop.xlane.xlu0 %1761
  %v1763 = vsel %vm773, %v1701, 0.0
  %1764 = vadd.xlane.f32.xlu0 %v1763
  %v1765 = vpop.xlane.xlu0 %1764
  %v1766 = vsel %vm773, %v1702, 0.0
  %1767 = vadd.xlane.f32.xlu0 %v1766
  %v1768 = vpop.xlane.xlu0 %1767
  %v1769 = vsel %vm773, %v1703, 0.0
  %1770 = vadd.xlane.f32.xlu0 %v1769
  %v1771 = vpop.xlane.xlu0 %1770
  %v1772 = vsel %vm773, %v1704, 0.0
  %1773 = vadd.xlane.f32.xlu0 %v1772
  %v1774 = vpop.xlane.xlu0 %1773
  %v1775 = vsel %vm773, %v1705, 0.0
  %1776 = vadd.xlane.f32.xlu0 %v1775
  %v1777 = vpop.xlane.xlu0 %1776
  %v1778 = vsel %vm773, %v1706, 0.0
  %1779 = vadd.xlane.f32.xlu0 %v1778
  %v1780 = vpop.xlane.xlu0 %1779
  %v1781 = vsel %vm773, %v1707, 0.0
  %1782 = vadd.xlane.f32.xlu0 %v1781
  %v1783 = vpop.xlane.xlu0 %1782
  %v1784 = vsel %vm773, %v1708, 0.0
  %1785 = vadd.xlane.f32.xlu0 %v1784
  %v1786 = vpop.xlane.xlu0 %1785
  %v1787 = vsel %vm773, %v1709, 0.0
  %1788 = vadd.xlane.f32.xlu0 %v1787
  %v1789 = vpop.xlane.xlu0 %1788
  %v1790 = vsel %vm773, %v1710, 0.0
  %1791 = vadd.xlane.f32.xlu0 %v1790
  %v1792 = vpop.xlane.xlu0 %1791
  %v1793 = vsel %vm773, %v1711, 0.0
  %1794 = vadd.xlane.f32.xlu0 %v1793
  %v1795 = vpop.xlane.xlu0 %1794
  %v1796 = vsel %vm773, %v1712, 0.0
  %1797 = vadd.xlane.f32.xlu0 %v1796
  %v1798 = vpop.xlane.xlu0 %1797
  %v1799 = vsel %vm773, %v1713, 0.0
  %1800 = vadd.xlane.f32.xlu0 %v1799
  %v1801 = vpop.xlane.xlu0 %1800
  %v1802 = vsel %vm773, %v1714, 0.0
  %1803 = vadd.xlane.f32.xlu0 %v1802
  %v1804 = vpop.xlane.xlu0 %1803
  %v1805 = vsel %vm773, %v1715, 0.0
  %1806 = vadd.xlane.f32.xlu0 %v1805
  %v1807 = vpop.xlane.xlu0 %1806
  %v1808 = vsel %vm773, %v1716, 0.0
  %1809 = vadd.xlane.f32.xlu0 %v1808
  %v1810 = vpop.xlane.xlu0 %1809
  %v1811 = vsel %vm773, %v1717, 0.0
  %1812 = vadd.xlane.f32.xlu0 %v1811
  %v1813 = vpop.xlane.xlu0 %1812
  %v1846 = vlaneseq
  %v1847 = vshrl.u32 %v1846, 7
  %v1848 = vsub.s32 %v903, %v1847
  %v1849 = vrot.slane %v1720, %v1848
  %v1850 = vlaneseq
  %v1851 = vshrl.u32 %v1850, 7
  %v1852 = vsub.s32 %v908, %v1851
  %v1853 = vrot.slane %v1723, %v1852
  %v1854 = vsel %vm913, %v1853, %v1849
  %v1855 = vlaneseq
  %v1856 = vshrl.u32 %v1855, 7
  %v1857 = vsub.s32 %v903, %v1856
  %v1858 = vrot.slane %v1726, %v1857
  %v1859 = vlaneseq
  %v1860 = vshrl.u32 %v1859, 7
  %v1861 = vsub.s32 %v908, %v1860
  %v1862 = vrot.slane %v1729, %v1861
  %v1863 = vsel %vm913, %v1862, %v1858
  %v1864 = vlaneseq
  %v1865 = vshrl.u32 %v1864, 7
  %v1866 = vsub.s32 %v903, %v1865
  %v1867 = vrot.slane %v1732, %v1866
  %v1868 = vlaneseq
  %v1869 = vshrl.u32 %v1868, 7
  %v1870 = vsub.s32 %v908, %v1869
  %v1871 = vrot.slane %v1735, %v1870
  %v1872 = vsel %vm913, %v1871, %v1867
  %v1873 = vlaneseq
  %v1874 = vshrl.u32 %v1873, 7
  %v1875 = vsub.s32 %v903, %v1874
  %v1876 = vrot.slane %v1738, %v1875
  %v1877 = vlaneseq
  %v1878 = vshrl.u32 %v1877, 7
  %v1879 = vsub.s32 %v908, %v1878
  %v1880 = vrot.slane %v1741, %v1879
  %v1881 = vsel %vm913, %v1880, %v1876
  %v1882 = vlaneseq
  %v1883 = vshrl.u32 %v1882, 7
  %v1884 = vsub.s32 %v903, %v1883
  %v1885 = vrot.slane %v1744, %v1884
  %v1886 = vlaneseq
  %v1887 = vshrl.u32 %v1886, 7
  %v1888 = vsub.s32 %v908, %v1887
  %v1889 = vrot.slane %v1747, %v1888
  %v1890 = vsel %vm913, %v1889, %v1885
  %v1891 = vlaneseq
  %v1892 = vshrl.u32 %v1891, 7
  %v1893 = vsub.s32 %v903, %v1892
  %v1894 = vrot.slane %v1750, %v1893
  %v1895 = vlaneseq
  %v1896 = vshrl.u32 %v1895, 7
  %v1897 = vsub.s32 %v908, %v1896
  %v1898 = vrot.slane %v1753, %v1897
  %v1899 = vsel %vm913, %v1898, %v1894
  %v1900 = vlaneseq
  %v1901 = vshrl.u32 %v1900, 7
  %v1902 = vsub.s32 %v903, %v1901
  %v1903 = vrot.slane %v1756, %v1902
  %v1904 = vlaneseq
  %v1905 = vshrl.u32 %v1904, 7
  %v1906 = vsub.s32 %v908, %v1905
  %v1907 = vrot.slane %v1759, %v1906
  %v1908 = vsel %vm913, %v1907, %v1903
  %v1909 = vlaneseq
  %v1910 = vshrl.u32 %v1909, 7
  %v1911 = vsub.s32 %v903, %v1910
  %v1912 = vrot.slane %v1762, %v1911
  %v1913 = vlaneseq
  %v1914 = vshrl.u32 %v1913, 7
  %v1915 = vsub.s32 %v908, %v1914
  %v1916 = vrot.slane %v1765, %v1915
  %v1917 = vsel %vm913, %v1916, %v1912
  %v1918 = vlaneseq
  %v1919 = vshrl.u32 %v1918, 7
  %v1920 = vsub.s32 %v903, %v1919
  %v1921 = vrot.slane %v1768, %v1920
  %v1922 = vlaneseq
  %v1923 = vshrl.u32 %v1922, 7
  %v1924 = vsub.s32 %v908, %v1923
  %v1925 = vrot.slane %v1771, %v1924
  %v1926 = vsel %vm913, %v1925, %v1921
  %v1927 = vlaneseq
  %v1928 = vshrl.u32 %v1927, 7
  %v1929 = vsub.s32 %v903, %v1928
  %v1930 = vrot.slane %v1774, %v1929
  %v1931 = vlaneseq
  %v1932 = vshrl.u32 %v1931, 7
  %v1933 = vsub.s32 %v908, %v1932
  %v1934 = vrot.slane %v1777, %v1933
  %v1935 = vsel %vm913, %v1934, %v1930
  %v1936 = vlaneseq
  %v1937 = vshrl.u32 %v1936, 7
  %v1938 = vsub.s32 %v903, %v1937
  %v1939 = vrot.slane %v1780, %v1938
  %v1940 = vlaneseq
  %v1941 = vshrl.u32 %v1940, 7
  %v1942 = vsub.s32 %v908, %v1941
  %v1943 = vrot.slane %v1783, %v1942
  %v1944 = vsel %vm913, %v1943, %v1939
  %v1945 = vlaneseq
  %v1946 = vshrl.u32 %v1945, 7
  %v1947 = vsub.s32 %v903, %v1946
  %v1948 = vrot.slane %v1786, %v1947
  %v1949 = vlaneseq
  %v1950 = vshrl.u32 %v1949, 7
  %v1951 = vsub.s32 %v908, %v1950
  %v1952 = vrot.slane %v1789, %v1951
  %v1953 = vsel %vm913, %v1952, %v1948
  %v1954 = vlaneseq
  %v1955 = vshrl.u32 %v1954, 7
  %v1956 = vsub.s32 %v903, %v1955
  %v1957 = vrot.slane %v1792, %v1956
  %v1958 = vlaneseq
  %v1959 = vshrl.u32 %v1958, 7
  %v1960 = vsub.s32 %v908, %v1959
  %v1961 = vrot.slane %v1795, %v1960
  %v1962 = vsel %vm913, %v1961, %v1957
  %v1963 = vlaneseq
  %v1964 = vshrl.u32 %v1963, 7
  %v1965 = vsub.s32 %v903, %v1964
  %v1966 = vrot.slane %v1798, %v1965
  %v1967 = vlaneseq
  %v1968 = vshrl.u32 %v1967, 7
  %v1969 = vsub.s32 %v908, %v1968
  %v1970 = vrot.slane %v1801, %v1969
  %v1971 = vsel %vm913, %v1970, %v1966
  %v1972 = vlaneseq
  %v1973 = vshrl.u32 %v1972, 7
  %v1974 = vsub.s32 %v903, %v1973
  %v1975 = vrot.slane %v1804, %v1974
  %v1976 = vlaneseq
  %v1977 = vshrl.u32 %v1976, 7
  %v1978 = vsub.s32 %v908, %v1977
  %v1979 = vrot.slane %v1807, %v1978
  %v1980 = vsel %vm913, %v1979, %v1975
  %v1981 = vlaneseq
  %v1982 = vshrl.u32 %v1981, 7
  %v1983 = vsub.s32 %v903, %v1982
  %v1984 = vrot.slane %v1810, %v1983
  %v1985 = vlaneseq
  %v1986 = vshrl.u32 %v1985, 7
  %v1987 = vsub.s32 %v908, %v1986
  %v1988 = vrot.slane %v1813, %v1987
  %v1989 = vsel %vm913, %v1988, %v1984
  %v1990 = vsel %vm1050, %v1863, %v1854
  %v1991 = vsel %vm1052, %v1872, %v1990
  %v1992 = vsel %vm1054, %v1881, %v1991
  %v1993 = vsel %vm1056, %v1890, %v1992
  %v1994 = vsel %vm1058, %v1899, %v1993
  %v1995 = vsel %vm1060, %v1908, %v1994
  %v1996 = vsel %vm1062, %v1917, %v1995
  %v1997 = vsel %vm1050, %v1935, %v1926
  %v1998 = vsel %vm1052, %v1944, %v1997
  %v1999 = vsel %vm1054, %v1953, %v1998
  %v2000 = vsel %vm1056, %v1962, %v1999
  %v2001 = vsel %vm1058, %v1971, %v2000
  %v2002 = vsel %vm1060, %v1980, %v2001
  %v2003 = vsel %vm1062, %v1989, %v2002
  %v2006 = vsel %vm28, %v1996, -1e+30
  %v2007 = vsel %vm29, %v2003, -1e+30
  %v2008 = vsel %vm773, %v2006, -inf
  %2009 = vmax.xlane.f32.xlu0 %v2008
  %v2010 = vpop.xlane.xlu0 %2009
  %v2011 = vsel %vm773, %v2007, -inf
  %2012 = vmax.xlane.f32.xlu0 %v2011
  %v2013 = vpop.xlane.xlu0 %2012
  %v2014 = vsub.f32 %v2006, %v2010
  %v2015 = vsub.f32 %v2007, %v2013
  %v2016 = vmul.f32 %v2014, 1.442695
  %v2017 = vpow.pop %v2016
  %v2018 = vmul.f32 %v2015, 1.442695
  %v2019 = vpow.pop %v2018
  %v2020 = vsel %vm28, %v2017, 0.0
  %v2021 = vsel %vm29, %v2019, 0.0
  %v2022 = vsel %vm773, %v2020, 0.0
  %2023 = vadd.xlane.f32.xlu0 %v2022
  %v2024 = vpop.xlane.xlu0 %2023
  %v2025 = vsel %vm773, %v2021, 0.0
  %2026 = vadd.xlane.f32.xlu0 %v2025
  %v2027 = vpop.xlane.xlu0 %2026
  %v2028 = vmax.f32 %v2024, 1e-30
  %v2029 = vmax.f32 %v2027, 1e-30
  %v2030 = vrcp.pop %v2028
  %v2031 = vrcp.pop %v2029
  %v2032 = vmul.f32 %v2020, %v2030
  %v2033 = vmul.f32 %v2021, %v2031
  %v2035 = vsel %vm773, %v2032, 0
  %v2038 = vsel %vm773, %v2033, 0
  %2040 = vmatprep.subr.mxu0 0.0
  %2041 = vmatpush1.msra.mxu0 0.0
  %2042 = vmatprep.subr.mxu0 0.0
  %2043 = vmatpush1.msra.mxu0 0.0
  %2044 = vmatprep.subr.mxu0 0.0
  %2045 = vmatpush1.msra.mxu0 0.0
  %2046 = vmatprep.subr.mxu0 0.0
  %2047 = vmatpush1.msra.mxu0 0.0
  %2048 = vmatprep.subr.mxu0 0.0
  %2049 = vmatpush1.msra.mxu0 0.0
  %2050 = vmatprep.subr.mxu0 0.0
  %2051 = vmatpush1.msra.mxu0 0.0
  %2052 = vmatprep.subr.mxu0 0.0
  %2053 = vmatpush1.msra.mxu0 0.0
  %2054 = vmatprep.subr.mxu0 0.0
  %2055 = vmatpush1.msra.mxu0 0.0
  %2056 = vmatprep.subr.mxu0 0.0
  %2057 = vmatpush1.msra.mxu0 0.0
  %2058 = vmatprep.subr.mxu0 0.0
  %2059 = vmatpush1.msra.mxu0 0.0
  %2060 = vmatprep.subr.mxu0 0.0
  %2061 = vmatpush1.msra.mxu0 0.0
  %2062 = vmatprep.subr.mxu0 0.0
  %2063 = vmatpush1.msra.mxu0 0.0
  %2064 = vmatprep.subr.mxu0 0.0
  %2065 = vmatpush1.msra.mxu0 0.0
  %2066 = vmatprep.subr.mxu0 0.0
  %2067 = vmatpush1.msra.mxu0 0.0
  %2068 = vmatprep.subr.mxu0 0.0
  %2069 = vmatpush1.msra.mxu0 %v1103
  %2070 = vmatprep.subr.mxu0 0.0
  %2071 = vmatpush1.msra.mxu0 %v1102
  %2072 = vmatprep.subr.mxu0 0.0
  %2073 = vmatpush2.msra.mxu0 0.0
  %2074 = vmatprep.subr.mxu0 0.0
  %2075 = vmatpush2.msra.mxu0 0.0
  %2076 = vmatprep.subr.mxu0 0.0
  %2077 = vmatpush2.msra.mxu0 0.0
  %2078 = vmatprep.subr.mxu0 0.0
  %2079 = vmatpush2.msra.mxu0 0.0
  %2080 = vmatprep.subr.mxu0 0.0
  %2081 = vmatpush2.msra.mxu0 0.0
  %2082 = vmatprep.subr.mxu0 0.0
  %2083 = vmatpush2.msra.mxu0 0.0
  %2084 = vmatprep.subr.mxu0 0.0
  %2085 = vmatpush2.msra.mxu0 0.0
  %2086 = vmatprep.subr.mxu0 0.0
  %2087 = vmatpush2.msra.mxu0 0.0
  %2088 = vmatprep.subr.mxu0 0.0
  %2089 = vmatpush2.msra.mxu0 0.0
  %2090 = vmatprep.subr.mxu0 0.0
  %2091 = vmatpush2.msra.mxu0 0.0
  %2092 = vmatprep.subr.mxu0 0.0
  %2093 = vmatpush2.msra.mxu0 0.0
  %2094 = vmatprep.subr.mxu0 0.0
  %2095 = vmatpush2.msra.mxu0 0.0
  %2096 = vmatprep.subr.mxu0 0.0
  %2097 = vmatpush2.msra.mxu0 0.0
  %2098 = vmatprep.subr.mxu0 0.0
  %2099 = vmatpush2.msra.mxu0 0.0
  %2100 = vmatprep.subr.mxu0 0.0
  %2101 = vmatpush2.msra.mxu0 0.0
  %2102 = vmatprep.subr.mxu0 0.0
  %2103 = vmatpush2.msra.mxu0 0.0
  %2104 = vmatprep.mubr.f32.mxu0 0.0
  %2105 = vmatmul.mubr.f32.gmra.mxu0 %v2035
  %v2106 = vpop.f32.mrf.mxu0
  %v2107 = vadd.f32 0.0, %v2106
  %v2108 = vpop.f32.mrf.mxu0
  %2109 = vmatprep.mubr.f32.mxu0 0.0
  %2110 = vmatmul.mubr.f32.gmra.mxu0 %v2038
  %v2111 = vpop.f32.mrf.mxu0
  %v2112 = vadd.f32 0.0, %v2111
  %v2113 = vpop.f32.mrf.mxu0
  %2114 = vdwg.mxu0
  %v2116 = vsel %vm773, %v1099, 0
  %v2119 = vsel %vm773, %v1100, 0
  %2121 = vmatprep.subr.mxu0 0.0
  %2122 = vmatpush1.msra.mxu0 0.0
  %2123 = vmatprep.subr.mxu0 0.0
  %2124 = vmatpush1.msra.mxu0 0.0
  %2125 = vmatprep.subr.mxu0 0.0
  %2126 = vmatpush1.msra.mxu0 0.0
  %2127 = vmatprep.subr.mxu0 0.0
  %2128 = vmatpush1.msra.mxu0 0.0
  %2129 = vmatprep.subr.mxu0 0.0
  %2130 = vmatpush1.msra.mxu0 0.0
  %2131 = vmatprep.subr.mxu0 0.0
  %2132 = vmatpush1.msra.mxu0 0.0
  %2133 = vmatprep.subr.mxu0 0.0
  %2134 = vmatpush1.msra.mxu0 0.0
  %2135 = vmatprep.subr.mxu0 0.0
  %2136 = vmatpush1.msra.mxu0 0.0
  %2137 = vmatprep.subr.mxu0 0.0
  %2138 = vmatpush1.msra.mxu0 0.0
  %2139 = vmatprep.subr.mxu0 0.0
  %2140 = vmatpush1.msra.mxu0 0.0
  %2141 = vmatprep.subr.mxu0 0.0
  %2142 = vmatpush1.msra.mxu0 0.0
  %2143 = vmatprep.subr.mxu0 0.0
  %2144 = vmatpush1.msra.mxu0 0.0
  %2145 = vmatprep.subr.mxu0 0.0
  %2146 = vmatpush1.msra.mxu0 0.0
  %2147 = vmatprep.subr.mxu0 0.0
  %2148 = vmatpush1.msra.mxu0 0.0
  %2149 = vmatprep.subr.mxu0 0.0
  %2150 = vmatpush1.msra.mxu0 %v63
  %2151 = vmatprep.subr.mxu0 0.0
  %2152 = vmatpush1.msra.mxu0 %v62
  %2153 = vmatprep.subr.mxu0 0.0
  %2154 = vmatpush2.msra.mxu0 0.0
  %2155 = vmatprep.subr.mxu0 0.0
  %2156 = vmatpush2.msra.mxu0 0.0
  %2157 = vmatprep.subr.mxu0 0.0
  %2158 = vmatpush2.msra.mxu0 0.0
  %2159 = vmatprep.subr.mxu0 0.0
  %2160 = vmatpush2.msra.mxu0 0.0
  %2161 = vmatprep.subr.mxu0 0.0
  %2162 = vmatpush2.msra.mxu0 0.0
  %2163 = vmatprep.subr.mxu0 0.0
  %2164 = vmatpush2.msra.mxu0 0.0
  %2165 = vmatprep.subr.mxu0 0.0
  %2166 = vmatpush2.msra.mxu0 0.0
  %2167 = vmatprep.subr.mxu0 0.0
  %2168 = vmatpush2.msra.mxu0 0.0
  %2169 = vmatprep.subr.mxu0 0.0
  %2170 = vmatpush2.msra.mxu0 0.0
  %2171 = vmatprep.subr.mxu0 0.0
  %2172 = vmatpush2.msra.mxu0 0.0
  %2173 = vmatprep.subr.mxu0 0.0
  %2174 = vmatpush2.msra.mxu0 0.0
  %2175 = vmatprep.subr.mxu0 0.0
  %2176 = vmatpush2.msra.mxu0 0.0
  %2177 = vmatprep.subr.mxu0 0.0
  %2178 = vmatpush2.msra.mxu0 0.0
  %2179 = vmatprep.subr.mxu0 0.0
  %2180 = vmatpush2.msra.mxu0 0.0
  %2181 = vmatprep.subr.mxu0 0.0
  %2182 = vmatpush2.msra.mxu0 0.0
  %2183 = vmatprep.subr.mxu0 0.0
  %2184 = vmatpush2.msra.mxu0 0.0
  %2185 = vmatprep.mubr.f32.mxu0 0.0
  %2186 = vmatmul.mubr.f32.gmra.mxu0 %v2116
  %v2187 = vpop.f32.mrf.mxu0
  %v2188 = vadd.f32 %v2107, %v2187
  %v2189 = vpop.f32.mrf.mxu0
  %2190 = vmatprep.mubr.f32.mxu0 0.0
  %2191 = vmatmul.mubr.f32.gmra.mxu0 %v2119
  %v2192 = vpop.f32.mrf.mxu0
  %v2193 = vadd.f32 %v2112, %v2192
  %v2194 = vpop.f32.mrf.mxu0
  %2195 = vdwg.mxu0
  %v2196 = vmul.f32 %v2188, 0.5
  %v2197 = vmul.f32 %v2193, 0.5
  %v2198 = vld [vmem:[%s6] sm:$0x1]
  %v2200 = vlaneseq
  %v2201 = vshrl.u32 %v2200, 7
  %v2202 = vsub.s32 0, %v2201
  %v2203 = vrot.slane %v2198, %v2202
  %v2205 = vadd.f32 %v2196, %v2203
  %v2206 = vadd.f32 %v2197, %v2203
  %2207 = vst.msk [vmem:[%s7] sm:$0xff] %vm773, %v2205
  %2208 = vst.msk [vmem:[%s7 + $0x8] sm:$0xff] %vm773, %v2206
  // Predicated region
  $region30: #{encoder_forward.3} parent=0 // pred_check
    _
  $region31: #{encoder_forward.3} parent=0 // pred_check_branch
    %2210 = sbr.rel (0) target = $region33
  $region32: #{encoder_forward.3} parent=0 // pred_region
    _
  $region33: #{encoder_forward.3} parent=0 // pred_fallthru
    _
  // Predicated region
  $region34: #{encoder_forward.3} parent=0 // pred_check
    _
  $region35: #{encoder_forward.3} parent=0 // pred_check_branch
    %2212 = sbr.rel (0) target = $region37
  $region36: #{encoder_forward.3} parent=0 // pred_region
    _
  $region37: #{encoder_forward.3} parent=0 // pred_fallthru
    _

</llo_original>
